<compile_context>
chip_gen: v7x
topology: tpu7x:2x2x1
jax: 0.10.0
libtpu: 0.0.40
codegen_flags: <defaults>
</compile_context>

<pallas_src>
import jax
import jax.numpy as jnp
from jax.experimental import pallas as pl
from jax.experimental.pallas import tpu as pltpu

LANE = 128      # lane width (last-dim tiling)
SUBLANE = 16    # bf16 sublane packing


def _round_up(n, m):
    return ((n + m - 1) // m) * m


def _elu(x):
    # ELU(alpha=1): x > 0 ? x : exp(x) - 1.  Clamp the exp argument so the untaken
    # branch never produces inf.  (exp(x)-1 instead of expm1 keeps the Mosaic lowering
    # simple; the reference below uses the identical formula so numerics match.)
    return jnp.where(x > 0, x, jnp.exp(jnp.minimum(x, 0.0)) - 1.0)


def _make_mlp_kernel(num_layers):
    """Kernel over one batch tile: x_ref, (w1,b1,...,wL,bL), o_ref."""

    def kernel(*refs):
        x_ref = refs[0]
        o_ref = refs[-1]
        wb = refs[1:-1]

        # In-kernel bf16 cast: x stays f32 / unpadded in HBM; the cast rides spare VALU.
        h = x_ref[...].astype(jnp.bfloat16)               # [TB, K0]
        for li in range(num_layers):
            w = wb[2 * li][...]                           # bf16 [in, out]  (VMEM-resident)
            b = wb[2 * li + 1][...]                       # f32  [1, out]
            z = jnp.dot(h, w, preferred_element_type=jnp.float32) + b
            if li < num_layers - 1:
                # ELU in f32, then immediately repack the inter-layer tile as bf16.
                h = _elu(z).astype(jnp.bfloat16)
                # TODO(synk): training-mode Dropout(p=0.4) omitted (eval = identity).
            else:
                # Sigmoid: exp + approximate reciprocal both ride the EUP slot.
                sig = pl.reciprocal(1.0 + jnp.exp(-z), approx=True)
                o_ref[...] = sig.astype(o_ref.dtype)

    return kernel


def prepare_params(params):
    """One-time weight/bias preparation (hoisted out of the per-call path).

    Weights -> bf16; contraction / hidden dims rounded only to the bf16 sublane
    multiple (16); ONLY the final layer's output dim is padded to 128 lanes
    (lane-dense HBM store).  Biases stay f32 (added after f32 MXU accumulation).
    Returns a flat tuple (w1, b1, ..., wL, bL).
    """
    num_layers = len(params) // 2
    dims = [params["w1"].shape[0]] + [params[f"w{i}"].shape[1]
                                      for i in range(1, num_layers + 1)]
    dims_p = [_round_up(d, SUBLANE) for d in dims[:-1]] + [_round_up(dims[-1], LANE)]

    prepared = []
    for li in range(1, num_layers + 1):
        w = params[f"w{li}"]
        b = params[f"b{li}"]
        in_p, out_p = dims_p[li - 1], dims_p[li]
        w_p = jnp.zeros((in_p, out_p), jnp.bfloat16)
        w_p = w_p.at[: w.shape[0], : w.shape[1]].set(w.astype(jnp.bfloat16))
        b_p = jnp.zeros((1, out_p), jnp.float32).at[:, : b.shape[1]].set(b)
        prepared += [w_p, b_p]
    return tuple(prepared)


def neural_net_forward(x, prepared, *, num_classes, tb_max=1024):
    """x: [batch, input_size] f32.  prepared: output of prepare_params()."""
    num_layers = len(prepared) // 2
    batch, input_size = x.shape
    k0 = prepared[0].shape[0]          # sublane-rounded input feature dim
    out_p = prepared[-2].shape[1]      # 128-lane-padded class dim

    # --- Batch tiling -----------------------------------------------------------------
    # Big tiles (up to tb_max rows) amortise the ~0.35us/step grid overhead; keep the
    # grid >= 2 whenever possible so "parallel" feeds both v7x TensorCores; padding
    # waste is bounded to < SUBLANE rows per tile (no round-up of batch to the tile).
    b_sub = _round_up(batch, SUBLANE)
    n_tiles = max(pl.cdiv(b_sub, tb_max), min(2, b_sub // SUBLANE), 1)
    tb = _round_up(pl.cdiv(b_sub, n_tiles), SUBLANE)
    grid_n = pl.cdiv(b_sub, tb)
    b_pad = grid_n * tb

    # x goes in as-is when already aligned (the common case); otherwise a minimal pad
    # (sublane/batch alignment only — never 128-lane feature padding).
    pad_rows, pad_cols = b_pad - batch, k0 - input_size
    if pad_rows or pad_cols:
        x = jnp.pad(x, ((0, pad_rows), (0, pad_cols)))

    in_specs = [pl.BlockSpec((tb, k0), lambda i: (i, 0))]
    for li in range(num_layers):
        w = prepared[2 * li]
        b = prepared[2 * li + 1]
        # Constant index_map -> weights/biases stay VMEM-resident across grid steps.
        in_specs.append(pl.BlockSpec(w.shape, lambda i: (0, 0)))
        in_specs.append(pl.BlockSpec(b.shape, lambda i: (0, 0)))
    out_specs = pl.BlockSpec((tb, out_p), lambda i: (i, 0))

    dims_p = [k0] + [prepared[2 * li].shape[1] for li in range(num_layers)]
    flops = 2 * b_pad * sum(dims_p[i] * dims_p[i + 1] for i in range(num_layers))
    transcendentals = b_pad * (sum(dims_p[1:-1]) + 2 * dims_p[-1])
    bytes_accessed = (b_pad * k0 * 4
                      + sum(int(a.size) * a.dtype.itemsize for a in prepared)
                      + b_pad * out_p * 2)

    out_padded = pl.pallas_call(
        _make_mlp_kernel(num_layers),
        out_shape=jax.ShapeDtypeStruct((b_pad, out_p), jnp.bfloat16),
        grid=(grid_n,),
        in_specs=in_specs,
        out_specs=out_specs,
        compiler_params=pltpu.CompilerParams(
            dimension_semantics=("parallel",),
            vmem_limit_bytes=32 * 1024 * 1024,
        ),
        cost_estimate=pl.CostEstimate(
            flops=flops,
            transcendentals=transcendentals,
            bytes_accessed=bytes_accessed,
        ),
    )(x, *prepared)

    # Slice away batch / class padding; return f32 like the PyTorch module.
    return out_padded[:batch, :num_classes].astype(jnp.float32)


def init_params(key, input_size, hidden_sizes, num_classes):
    """Deterministic synthetic parameters (same shapes as the PyTorch module).
    Weights stored as [in_features, out_features] (transpose of nn.Linear.weight)."""
    dims = [input_size] + list(hidden_sizes) + [num_classes]
    ks = jax.random.split(key, 2 * (len(dims) - 1))
    params = {}
    for i in range(len(dims) - 1):
        fan_in, fan_out = dims[i], dims[i + 1]
        scale = 1.0 / jnp.sqrt(fan_in)
        params[f"w{i + 1}"] = jax.random.uniform(
            ks[2 * i], (fan_in, fan_out), jnp.float32, -1.0, 1.0) * scale
        params[f"b{i + 1}"] = jax.random.uniform(
            ks[2 * i + 1], (1, fan_out), jnp.float32, -1.0, 1.0) * scale
    return params


def reference_forward(x, params):
    """Pure-JAX reference matching the kernel's numerics (bf16 matmul operands,
    f32 accumulation/elementwise; exact sigmoid vs kernel's approx reciprocal +
    bf16 output store)."""
    num_layers = len(params) // 2
    h = x.astype(jnp.bfloat16)
    for i in range(1, num_layers + 1):
        w = params[f"w{i}"].astype(jnp.bfloat16)
        b = params[f"b{i}"]
        z = jnp.dot(h, w, preferred_element_type=jnp.float32) + b
        h = _elu(z).astype(jnp.bfloat16) if i < num_layers else jax.nn.sigmoid(z)
    return h


if __name__ == "__main__":
    input_size = 32
    hidden_sizes = [32, 32]
    num_classes = 1
    batch = 512  # -> 2 batch tiles of 256 rows (exercises the grid / both v7x cores)

    key = jax.random.PRNGKey(0)
    kx, kp = jax.random.split(key)
    x = jax.random.normal(kx, (batch, input_size), jnp.float32)
    params = init_params(kp, input_size, hidden_sizes, num_classes)

    prepared = prepare_params(params)  # one-time: hoisted out of the per-call path
    fwd = jax.jit(neural_net_forward, static_argnames=("num_classes", "tb_max"))

    out = jax.block_until_ready(fwd(x, prepared, num_classes=num_classes))
    ref = reference_forward(x, params)

    assert out.shape == (batch, num_classes)
    max_err = float(jnp.max(jnp.abs(out - ref)))
    # Tolerance covers the EUP approx-reciprocal sigmoid (~2^-12 rel) plus bf16 output
    # quantization (<= ~2e-3 abs) against the exact-f32-sigmoid reference.
    assert max_err < 8e-3, f"max abs err {max_err}"
    print("KERNEL_OK")
</pallas_src>

<mosaic_0001>
module attributes {stable_mosaic.version = 11 : i64} {
  func.func @kernel(%arg0: i32, %arg1: memref<256x32xf32, #tpu.memory_space<vmem>>, %arg2: memref<32x32xbf16, #tpu.memory_space<vmem>>, %arg3: memref<1x32xf32, #tpu.memory_space<vmem>>, %arg4: memref<32x32xbf16, #tpu.memory_space<vmem>>, %arg5: memref<1x32xf32, #tpu.memory_space<vmem>>, %arg6: memref<32x128xbf16, #tpu.memory_space<vmem>>, %arg7: memref<1x128xf32, #tpu.memory_space<vmem>>, %arg8: memref<256x128xbf16, #tpu.memory_space<vmem>>) attributes {dimension_semantics = [#tpu.dimension_semantics<parallel>], iteration_bounds = array<i64: 2>, scalar_prefetch = 0 : i64, scratch_operands = 0 : i64, tpu.core_type = #tpu.core_type<tc>, window_params = [{transform_indices = @transform_0, window_bounds = array<i64: 256, 32>}, {pipeline_mode = #tpu.pipeline_mode<synchronous>, transform_indices = @transform_1, window_bounds = array<i64: 32, 32>}, {pipeline_mode = #tpu.pipeline_mode<synchronous>, transform_indices = @transform_2, window_bounds = array<i64: 1, 32>}, {pipeline_mode = #tpu.pipeline_mode<synchronous>, transform_indices = @transform_3, window_bounds = array<i64: 32, 32>}, {pipeline_mode = #tpu.pipeline_mode<synchronous>, transform_indices = @transform_4, window_bounds = array<i64: 1, 32>}, {pipeline_mode = #tpu.pipeline_mode<synchronous>, transform_indices = @transform_5, window_bounds = array<i64: 32, 128>}, {pipeline_mode = #tpu.pipeline_mode<synchronous>, transform_indices = @transform_6, window_bounds = array<i64: 1, 128>}, {transform_indices = @transform_7, window_bounds = array<i64: 256, 128>}]} {
    %c0 = arith.constant 0 : index
    %c0_0 = arith.constant 0 : index
    %0 = vector.load %arg1[%c0, %c0_0] : memref<256x32xf32, #tpu.memory_space<vmem>>, vector<256x32xf32>
    %1 = arith.truncf %0 : vector<256x32xf32> to vector<256x32xbf16>
    %c0_1 = arith.constant 0 : index
    %c0_2 = arith.constant 0 : index
    %2 = vector.load %arg2[%c0_1, %c0_2] : memref<32x32xbf16, #tpu.memory_space<vmem>>, vector<32x32xbf16>
    %c0_3 = arith.constant 0 : index
    %c0_4 = arith.constant 0 : index
    %3 = vector.load %arg3[%c0_3, %c0_4] : memref<1x32xf32, #tpu.memory_space<vmem>>, vector<1x32xf32>
    %cst = arith.constant dense<0.000000e+00> : vector<256x32xf32>
    %4 = tpu.matmul %1, %2, %cst {dimension_numbers = #tpu.dot_dimension_numbers<[1], [0], [0], [1], [0, 0, 1, 1], [], []>} : vector<256x32xbf16>, vector<32x32xbf16>, vector<256x32xf32> -> vector<256x32xf32>
    %5 = vector.broadcast %3 : vector<1x32xf32> to vector<256x32xf32>
    %6 = arith.addf %4, %5 : vector<256x32xf32>
    %cst_5 = arith.constant 0.000000e+00 : f32
    %7 = vector.broadcast %cst_5 : f32 to vector<256x32xf32>
    %8 = arith.cmpf ogt, %6, %7 : vector<256x32xf32>
    %cst_6 = arith.constant 0.000000e+00 : f32
    %9 = vector.broadcast %cst_6 : f32 to vector<256x32xf32>
    %10 = arith.minimumf %6, %9 : vector<256x32xf32>
    %11 = math.exp %10 : vector<256x32xf32>
    %cst_7 = arith.constant 1.000000e+00 : f32
    %12 = vector.broadcast %cst_7 : f32 to vector<256x32xf32>
    %13 = arith.subf %11, %12 : vector<256x32xf32>
    %14 = arith.select %8, %6, %13 : vector<256x32xi1>, vector<256x32xf32>
    %15 = arith.truncf %14 : vector<256x32xf32> to vector<256x32xbf16>
    %c0_8 = arith.constant 0 : index
    %c0_9 = arith.constant 0 : index
    %16 = vector.load %arg4[%c0_8, %c0_9] : memref<32x32xbf16, #tpu.memory_space<vmem>>, vector<32x32xbf16>
    %c0_10 = arith.constant 0 : index
    %c0_11 = arith.constant 0 : index
    %17 = vector.load %arg5[%c0_10, %c0_11] : memref<1x32xf32, #tpu.memory_space<vmem>>, vector<1x32xf32>
    %cst_12 = arith.constant dense<0.000000e+00> : vector<256x32xf32>
    %18 = tpu.matmul %15, %16, %cst_12 {dimension_numbers = #tpu.dot_dimension_numbers<[1], [0], [0], [1], [0, 0, 1, 1], [], []>} : vector<256x32xbf16>, vector<32x32xbf16>, vector<256x32xf32> -> vector<256x32xf32>
    %19 = vector.broadcast %17 : vector<1x32xf32> to vector<256x32xf32>
    %20 = arith.addf %18, %19 : vector<256x32xf32>
    %cst_13 = arith.constant 0.000000e+00 : f32
    %21 = vector.broadcast %cst_13 : f32 to vector<256x32xf32>
    %22 = arith.cmpf ogt, %20, %21 : vector<256x32xf32>
    %cst_14 = arith.constant 0.000000e+00 : f32
    %23 = vector.broadcast %cst_14 : f32 to vector<256x32xf32>
    %24 = arith.minimumf %20, %23 : vector<256x32xf32>
    %25 = math.exp %24 : vector<256x32xf32>
    %cst_15 = arith.constant 1.000000e+00 : f32
    %26 = vector.broadcast %cst_15 : f32 to vector<256x32xf32>
    %27 = arith.subf %25, %26 : vector<256x32xf32>
    %28 = arith.select %22, %20, %27 : vector<256x32xi1>, vector<256x32xf32>
    %29 = arith.truncf %28 : vector<256x32xf32> to vector<256x32xbf16>
    %c0_16 = arith.constant 0 : index
    %c0_17 = arith.constant 0 : index
    %30 = vector.load %arg6[%c0_16, %c0_17] : memref<32x128xbf16, #tpu.memory_space<vmem>>, vector<32x128xbf16>
    %c0_18 = arith.constant 0 : index
    %c0_19 = arith.constant 0 : index
    %31 = vector.load %arg7[%c0_18, %c0_19] : memref<1x128xf32, #tpu.memory_space<vmem>>, vector<1x128xf32>
    %cst_20 = arith.constant dense<0.000000e+00> : vector<256x128xf32>
    %32 = tpu.matmul %29, %30, %cst_20 {dimension_numbers = #tpu.dot_dimension_numbers<[1], [0], [0], [1], [0, 0, 1, 1], [], []>} : vector<256x32xbf16>, vector<32x128xbf16>, vector<256x128xf32> -> vector<256x128xf32>
    %33 = vector.broadcast %31 : vector<1x128xf32> to vector<256x128xf32>
    %34 = arith.addf %32, %33 : vector<256x128xf32>
    %cst_21 = arith.constant 0.000000e+00 : f32
    %35 = vector.broadcast %cst_21 : f32 to vector<256x128xf32>
    %36 = arith.subf %35, %34 : vector<256x128xf32>
    %37 = math.exp %36 : vector<256x128xf32>
    %cst_22 = arith.constant 1.000000e+00 : f32
    %38 = vector.broadcast %cst_22 : f32 to vector<256x128xf32>
    %39 = arith.addf %38, %37 : vector<256x128xf32>
    %40 = tpu.reciprocal %39 {approx = true} : vector<256x128xf32> -> vector<256x128xf32>
    %41 = arith.truncf %40 : vector<256x128xf32> to vector<256x128xbf16>
    %c0_23 = arith.constant 0 : index
    %c0_24 = arith.constant 0 : index
    %42 = vector.load %arg8[%c0_23, %c0_24] : memref<256x128xbf16, #tpu.memory_space<vmem>>, vector<256x128xbf16>
    tpu.vector_store %arg8[%c0_23, %c0_24], %41 {strides = array<i32>} : memref<256x128xbf16, #tpu.memory_space<vmem>>, vector<256x128xbf16>,
    return
  }
  func.func @transform_0(%arg0: i32) -> (i32, i32) {
    %c0_i32 = arith.constant 0 : i32
    %c0_i32_0 = arith.constant 0 : i32
    return %arg0, %c0_i32 : i32, i32
  }
  func.func @transform_1(%arg0: i32) -> (i32, i32) {
    %c0_i32 = arith.constant 0 : i32
    %c0_i32_0 = arith.constant 0 : i32
    %c0_i32_1 = arith.constant 0 : i32
    return %c0_i32, %c0_i32_0 : i32, i32
  }
  func.func @transform_2(%arg0: i32) -> (i32, i32) {
    %c0_i32 = arith.constant 0 : i32
    %c0_i32_0 = arith.constant 0 : i32
    %c0_i32_1 = arith.constant 0 : i32
    return %c0_i32, %c0_i32_0 : i32, i32
  }
  func.func @transform_3(%arg0: i32) -> (i32, i32) {
    %c0_i32 = arith.constant 0 : i32
    %c0_i32_0 = arith.constant 0 : i32
    %c0_i32_1 = arith.constant 0 : i32
    return %c0_i32, %c0_i32_0 : i32, i32
  }
  func.func @transform_4(%arg0: i32) -> (i32, i32) {
    %c0_i32 = arith.constant 0 : i32
    %c0_i32_0 = arith.constant 0 : i32
    %c0_i32_1 = arith.constant 0 : i32
    return %c0_i32, %c0_i32_0 : i32, i32
  }
  func.func @transform_5(%arg0: i32) -> (i32, i32) {
    %c0_i32 = arith.constant 0 : i32
    %c0_i32_0 = arith.constant 0 : i32
    %c0_i32_1 = arith.constant 0 : i32
    return %c0_i32, %c0_i32_0 : i32, i32
  }
  func.func @transform_6(%arg0: i32) -> (i32, i32) {
    %c0_i32 = arith.constant 0 : i32
    %c0_i32_0 = arith.constant 0 : i32
    %c0_i32_1 = arith.constant 0 : i32
    return %c0_i32, %c0_i32_0 : i32, i32
  }
  func.func @transform_7(%arg0: i32) -> (i32, i32) {
    %c0_i32 = arith.constant 0 : i32
    %c0_i32_0 = arith.constant 0 : i32
    return %arg0, %c0_i32 : i32, i32
  }
}

</mosaic_0001>

<llo_original>
// kernel: neural_net_forward.1
$region0: #{neural_net_forward.1}
  #allocation0 [shape = 'u32[]', space=smem, size = 0x4, offset = 0x4, fixed_abs, tag = 'smem constant byte address 0x4 - core index']
  #allocation1 [shape = 'u32[144,128]{1,0:T(1,128)}', space=vmem, size = 0x12000, scoped, tag = 'internal scratch']
  %s0 = inlined_call_operand.vmem [shape: f32[512,32], index: 0, kind: input, shape index: {}]
  %s1 = inlined_call_operand.vmem [shape: bf16[32,32], index: 1, kind: input, shape index: {}]
  %s2 = inlined_call_operand.vmem [shape: f32[1,32], index: 2, kind: input, shape index: {}]
  %s3 = inlined_call_operand.vmem [shape: bf16[32,32], index: 3, kind: input, shape index: {}]
  %s4 = inlined_call_operand.vmem [shape: f32[1,32], index: 4, kind: input, shape index: {}]
  %s5 = inlined_call_operand.vmem [shape: bf16[32,128], index: 5, kind: input, shape index: {}]
  %s6 = inlined_call_operand.vmem [shape: f32[1,128], index: 6, kind: input, shape index: {}]
  %s7 = inlined_call_operand.vmem [shape: bf16[512,128], index: 7, kind: output, shape index: {}]
  %s8 = sld [smem:[#allocation0]]
  $region61: #{neural_net_forward.1} parent=0
    _
  %s10 = ssub.s32 1, %s8
  %s11 = scalar_select 0, %s10, %s8
  loop: start=0, step=1, limit=4
  $region2: #{neural_net_forward.1} parent=0 // loop_pre_header
    _
  $region3: #{neural_net_forward.1} parent=0 // loop_header
    %s13 = sphi 0, %s17
    %p14 = scmp.ge.s32.totalorder %s13, 4
    %s23 = sphi 0, %s25
    %s26 = sphi 0, %s23
    %s27 = sphi 0, %s26
    %s43 = sphi 0, %s27
    %s47 = sphi 0, %s47
    %s49 = sphi 0, %s47
    %s50 = sphi 0, %s49
    %s64 = sphi 0, %s50
    %s68 = sphi 0, %s68
    %s70 = sphi 0, %s68
    %s71 = sphi 0, %s70
    %s85 = sphi 0, %s71
    %s89 = sphi 0, %s89
    %s91 = sphi 0, %s89
    %s92 = sphi 0, %s91
    %s106 = sphi 0, %s92
    %s110 = sphi 0, %s110
    %s112 = sphi 0, %s110
    %s113 = sphi 0, %s112
    %s127 = sphi 0, %s113
    %s131 = sphi 0, %s131
    %s133 = sphi 0, %s131
    %s134 = sphi 0, %s133
    %s148 = sphi 0, %s134
    %s152 = sphi 0, %s152
    %s154 = sphi 0, %s152
    %s155 = sphi 0, %s154
    %s169 = sphi 0, %s155
    %s175 = sphi 0, %s177
    %s178 = sphi 0, %s175
    %s179 = sphi 0, %s178
    %s195 = sphi 0, %s179
  $region4: #{neural_net_forward.1} parent=0 // loop_header_branch
    %16 = sbr.rel (%p14) target = $region8
  $region5: #{neural_net_forward.1} parent=0 // loop_body
    %s18 = ssub.s32 %s13, 1
    %s19 = ssub.s32 %s13, 2
    %s20 = sadd.s32 %s13, 1
    %s21 = ssub.s32 %s13, %s20
    %p22 = scmp.eq.s32.totalorder %s21, 0
    %s24 = sadd.s32 %s23, 1
    %s25 = scalar_select %p22, %s23, %s24
    %p28 = pneg %p22
    %p29 = scmp.eq.s32.totalorder %s13, 1
    %p30 = por %p28, %p29
    %p31 = scmp.ne.s32.totalorder %s23, %s26
    %p32 = scmp.eq.s32.totalorder %s13, 0
    %p33 = por %p31, %p32
    %p34 = scmp.ne.s32.totalorder %s23, %s26
    %p35 = scmp.eq.s32.totalorder %s18, 1
    %p36 = por %p34, %p35
    %p37 = scmp.ne.s32.totalorder %s26, %s27
    %p38 = scmp.eq.s32.totalorder %s18, 0
    %p39 = por %p37, %p38
    %p40 = scmp.ne.s32.totalorder %s26, %s27
    %p41 = scmp.eq.s32.totalorder %s19, 1
    %p42 = por %p40, %p41
    %p44 = scmp.ne.s32.totalorder %s27, %s43
    %p45 = scmp.eq.s32.totalorder %s19, 0
    %p46 = por %p44, %p45
    %s48 = sadd.s32 %s47, 1
    %p51 = scmp.eq.s32.totalorder %s13, 1
    %p52 = scmp.ne.s32.totalorder %s47, %s49
    %p53 = scmp.eq.s32.totalorder %s13, 0
    %p54 = por %p52, %p53
    %p55 = scmp.ne.s32.totalorder %s47, %s49
    %p56 = scmp.eq.s32.totalorder %s18, 1
    %p57 = por %p55, %p56
    %p58 = scmp.ne.s32.totalorder %s49, %s50
    %p59 = scmp.eq.s32.totalorder %s18, 0
    %p60 = por %p58, %p59
    %p61 = scmp.ne.s32.totalorder %s49, %s50
    %p62 = scmp.eq.s32.totalorder %s19, 1
    %p63 = por %p61, %p62
    %p65 = scmp.ne.s32.totalorder %s50, %s64
    %p66 = scmp.eq.s32.totalorder %s19, 0
    %p67 = por %p65, %p66
    %s69 = sadd.s32 %s68, 1
    %p72 = scmp.eq.s32.totalorder %s13, 1
    %p73 = scmp.ne.s32.totalorder %s68, %s70
    %p74 = scmp.eq.s32.totalorder %s13, 0
    %p75 = por %p73, %p74
    %p76 = scmp.ne.s32.totalorder %s68, %s70
    %p77 = scmp.eq.s32.totalorder %s18, 1
    %p78 = por %p76, %p77
    %p79 = scmp.ne.s32.totalorder %s70, %s71
    %p80 = scmp.eq.s32.totalorder %s18, 0
    %p81 = por %p79, %p80
    %p82 = scmp.ne.s32.totalorder %s70, %s71
    %p83 = scmp.eq.s32.totalorder %s19, 1
    %p84 = por %p82, %p83
    %p86 = scmp.ne.s32.totalorder %s71, %s85
    %p87 = scmp.eq.s32.totalorder %s19, 0
    %p88 = por %p86, %p87
    %s90 = sadd.s32 %s89, 1
    %p93 = scmp.eq.s32.totalorder %s13, 1
    %p94 = scmp.ne.s32.totalorder %s89, %s91
    %p95 = scmp.eq.s32.totalorder %s13, 0
    %p96 = por %p94, %p95
    %p97 = scmp.ne.s32.totalorder %s89, %s91
    %p98 = scmp.eq.s32.totalorder %s18, 1
    %p99 = por %p97, %p98
    %p100 = scmp.ne.s32.totalorder %s91, %s92
    %p101 = scmp.eq.s32.totalorder %s18, 0
    %p102 = por %p100, %p101
    %p103 = scmp.ne.s32.totalorder %s91, %s92
    %p104 = scmp.eq.s32.totalorder %s19, 1
    %p105 = por %p103, %p104
    %p107 = scmp.ne.s32.totalorder %s92, %s106
    %p108 = scmp.eq.s32.totalorder %s19, 0
    %p109 = por %p107, %p108
    %s111 = sadd.s32 %s110, 1
    %p114 = scmp.eq.s32.totalorder %s13, 1
    %p115 = scmp.ne.s32.totalorder %s110, %s112
    %p116 = scmp.eq.s32.totalorder %s13, 0
    %p117 = por %p115, %p116
    %p118 = scmp.ne.s32.totalorder %s110, %s112
    %p119 = scmp.eq.s32.totalorder %s18, 1
    %p120 = por %p118, %p119
    %p121 = scmp.ne.s32.totalorder %s112, %s113
    %p122 = scmp.eq.s32.totalorder %s18, 0
    %p123 = por %p121, %p122
    %p124 = scmp.ne.s32.totalorder %s112, %s113
    %p125 = scmp.eq.s32.totalorder %s19, 1
    %p126 = por %p124, %p125
    %p128 = scmp.ne.s32.totalorder %s113, %s127
    %p129 = scmp.eq.s32.totalorder %s19, 0
    %p130 = por %p128, %p129
    %s132 = sadd.s32 %s131, 1
    %p135 = scmp.eq.s32.totalorder %s13, 1
    %p136 = scmp.ne.s32.totalorder %s131, %s133
    %p137 = scmp.eq.s32.totalorder %s13, 0
    %p138 = por %p136, %p137
    %p139 = scmp.ne.s32.totalorder %s131, %s133
    %p140 = scmp.eq.s32.totalorder %s18, 1
    %p141 = por %p139, %p140
    %p142 = scmp.ne.s32.totalorder %s133, %s134
    %p143 = scmp.eq.s32.totalorder %s18, 0
    %p144 = por %p142, %p143
    %p145 = scmp.ne.s32.totalorder %s133, %s134
    %p146 = scmp.eq.s32.totalorder %s19, 1
    %p147 = por %p145, %p146
    %p149 = scmp.ne.s32.totalorder %s134, %s148
    %p150 = scmp.eq.s32.totalorder %s19, 0
    %p151 = por %p149, %p150
    %s153 = sadd.s32 %s152, 1
    %p156 = scmp.eq.s32.totalorder %s13, 1
    %p157 = scmp.ne.s32.totalorder %s152, %s154
    %p158 = scmp.eq.s32.totalorder %s13, 0
    %p159 = por %p157, %p158
    %p160 = scmp.ne.s32.totalorder %s152, %s154
    %p161 = scmp.eq.s32.totalorder %s18, 1
    %p162 = por %p160, %p161
    %p163 = scmp.ne.s32.totalorder %s154, %s155
    %p164 = scmp.eq.s32.totalorder %s18, 0
    %p165 = por %p163, %p164
    %p166 = scmp.ne.s32.totalorder %s154, %s155
    %p167 = scmp.eq.s32.totalorder %s19, 1
    %p168 = por %p166, %p167
    %p170 = scmp.ne.s32.totalorder %s155, %s169
    %p171 = scmp.eq.s32.totalorder %s19, 0
    %p172 = por %p170, %p171
    %s173 = ssub.s32 %s13, %s20
    %p174 = scmp.eq.s32.totalorder %s173, 0
    %s176 = sadd.s32 %s175, 1
    %s177 = scalar_select %p174, %s175, %s176
    %p180 = pneg %p174
    %p181 = scmp.eq.s32.totalorder %s13, 1
    %p182 = por %p180, %p181
    %p183 = scmp.ne.s32.totalorder %s175, %s178
    %p184 = scmp.eq.s32.totalorder %s13, 0
    %p185 = por %p183, %p184
    %p186 = scmp.ne.s32.totalorder %s175, %s178
    %p187 = scmp.eq.s32.totalorder %s18, 1
    %p188 = por %p186, %p187
    %p189 = scmp.ne.s32.totalorder %s178, %s179
    %p190 = scmp.eq.s32.totalorder %s18, 0
    %p191 = por %p189, %p190
    %p192 = scmp.ne.s32.totalorder %s178, %s179
    %p193 = scmp.eq.s32.totalorder %s19, 1
    %p194 = por %p192, %p193
    %p196 = scmp.ne.s32.totalorder %s179, %s195
    %p197 = scmp.eq.s32.totalorder %s19, 0
    %p198 = por %p196, %p197
    %p199 = scmp.le.s32.totalorder 1, %s13
    %p200 = scmp.lt.s32.totalorder %s13, 3
    %p201 = pnand %p199, %p200
    %p202 = pneg %p201
    // Predicated region
    $region9: #{neural_net_forward.1} parent=5 // pred_check
      _
    $region10: #{neural_net_forward.1} parent=5 // pred_check_branch
      %204 = sbr.rel (%p201) target = $region12
    $region11: #{neural_net_forward.1} parent=5 // pred_region
      %s205 = ssub.s32 %s13, 1
      // Predicated region
      $region13: #{neural_net_forward.1} parent=11 // pred_check
        %p206 = pneg %p60
      $region14: #{neural_net_forward.1} parent=11 // pred_check_branch
        %208 = sbr.rel (%p206) target = $region16
      $region15: #{neural_net_forward.1} parent=11 // pred_region
        _
      $region16: #{neural_net_forward.1} parent=11 // pred_fallthru
        _
      // Predicated region
      $region17: #{neural_net_forward.1} parent=11 // pred_check
        %p209 = pneg %p81
      $region18: #{neural_net_forward.1} parent=11 // pred_check_branch
        %211 = sbr.rel (%p209) target = $region20
      $region19: #{neural_net_forward.1} parent=11 // pred_region
        _
      $region20: #{neural_net_forward.1} parent=11 // pred_fallthru
        _
      // Predicated region
      $region21: #{neural_net_forward.1} parent=11 // pred_check
        %p212 = pneg %p102
      $region22: #{neural_net_forward.1} parent=11 // pred_check_branch
        %214 = sbr.rel (%p212) target = $region24
      $region23: #{neural_net_forward.1} parent=11 // pred_region
        _
      $region24: #{neural_net_forward.1} parent=11 // pred_fallthru
        _
      // Predicated region
      $region25: #{neural_net_forward.1} parent=11 // pred_check
        %p215 = pneg %p123
      $region26: #{neural_net_forward.1} parent=11 // pred_check_branch
        %217 = sbr.rel (%p215) target = $region28
      $region27: #{neural_net_forward.1} parent=11 // pred_region
        _
      $region28: #{neural_net_forward.1} parent=11 // pred_fallthru
        _
      // Predicated region
      $region29: #{neural_net_forward.1} parent=11 // pred_check
        %p218 = pneg %p144
      $region30: #{neural_net_forward.1} parent=11 // pred_check_branch
        %220 = sbr.rel (%p218) target = $region32
      $region31: #{neural_net_forward.1} parent=11 // pred_region
        _
      $region32: #{neural_net_forward.1} parent=11 // pred_fallthru
        _
      // Predicated region
      $region33: #{neural_net_forward.1} parent=11 // pred_check
        %p221 = pneg %p165
      $region34: #{neural_net_forward.1} parent=11 // pred_check_branch
        %223 = sbr.rel (%p221) target = $region36
      $region35: #{neural_net_forward.1} parent=11 // pred_region
        _
      $region36: #{neural_net_forward.1} parent=11 // pred_fallthru
        _
    $region12: #{neural_net_forward.1} parent=5 // pred_fallthru
      _
    %p224 = scmp.lt.s32.totalorder %s13, 2
    // Predicated region
    $region37: #{neural_net_forward.1} parent=5 // pred_check
      %p225 = pneg %p224
    $region38: #{neural_net_forward.1} parent=5 // pred_check_branch
      %227 = sbr.rel (%p225) target = $region40
    $region39: #{neural_net_forward.1} parent=5 // pred_region
      // Predicated region
      $region41: #{neural_net_forward.1} parent=39 // pred_check
        %p228 = pneg %p33
      $region42: #{neural_net_forward.1} parent=39 // pred_check_branch
        %230 = sbr.rel (%p228) target = $region44
      $region43: #{neural_net_forward.1} parent=39 // pred_region
        %s231 = smul.u32 32, %s13
        %p232 = scmp.lt.s32.totalorder %s231, 63
        %s233 = scalar_select %p232, %s231, 63
        %s234 = smul.addr %s233, 8
        %s235 = scalar_lea.vmem %s0, %s234
        %s236 = smul.u32 32, %s13
      $region44: #{neural_net_forward.1} parent=39 // pred_fallthru
        _
    $region40: #{neural_net_forward.1} parent=5 // pred_fallthru
      _
    %p237 = scmp.le.s32.totalorder 1, %s13
    %p238 = scmp.lt.s32.totalorder %s13, 3
    %p239 = pnand %p237, %p238
    %p240 = pneg %p239
    // Predicated region
    $region45: #{neural_net_forward.1} parent=5 // pred_check
      _
    $region46: #{neural_net_forward.1} parent=5 // pred_check_branch
      %242 = sbr.rel (%p239) target = $region48
    $region47: #{neural_net_forward.1} parent=5 // pred_region
      %s243 = ssub.s32 %s13, 1
      %s244 = smul.u32 32, %s18
      %p245 = scmp.lt.s32.totalorder %s244, 63
      %s246 = scalar_select %p245, %s244, 63
      %s247 = smul.addr %s246, 8
      %s248 = scalar_lea.vmem %s0, %s247
      %p249 = pneg %p39
      %p250 = pneg %p36
      %p251 = pneg %p60
      %p252 = pneg %p57
      %p253 = pneg %p81
      %p254 = pneg %p78
      %p255 = pneg %p102
      %p256 = pneg %p99
      %p257 = pneg %p123
      %p258 = pneg %p120
      %p259 = pneg %p144
      %p260 = pneg %p141
      %p261 = pneg %p165
      %p262 = pneg %p162
      %p263 = pneg %p191
      %p264 = pneg %p188
      %s265 = smul.u32 32, %s18
      %p266 = scmp.lt.s32.totalorder %s265, 63
      %s267 = scalar_select %p266, %s265, 63
      %s268 = smul.addr %s267, 4
      %s269 = scalar_lea.vmem %s7, %s268
      %s270 = smul.u32 32, %s18
      %p271 = scmp.lt.s32.totalorder %s270, 63
      %s272 = scalar_select %p271, %s270, 63
      %s273 = smul.addr %s272, 8
      %s274 = scalar_lea.vmem %s0, %s273
      %s275 = smul.u32 32, %s18
      %s276 = smul.u32 32, %s18
      %p277 = scmp.lt.s32.totalorder %s276, 63
      %s278 = scalar_select %p277, %s276, 63
      %s279 = smul.addr %s278, 4
      %s280 = scalar_lea.vmem %s7, %s279
      %s281 = smul.u32 32, %s18
      %v283 = vld [vmem:[%s274] sm:$0xff]
      %v284 = vld [vmem:[%s274 + $0x8] sm:$0xff]
      %v285 = vld [vmem:[%s274 + $0x10] sm:$0xff]
      %v286 = vld [vmem:[%s274 + $0x18] sm:$0xff]
      %v287 = vld [vmem:[%s274 + $0x20] sm:$0xff]
      %v288 = vld [vmem:[%s274 + $0x28] sm:$0xff]
      %v289 = vld [vmem:[%s274 + $0x30] sm:$0xff]
      %v290 = vld [vmem:[%s274 + $0x38] sm:$0xff]
      %v291 = vld [vmem:[%s274 + $0x40] sm:$0xff]
      %v292 = vld [vmem:[%s274 + $0x48] sm:$0xff]
      %v293 = vld [vmem:[%s274 + $0x50] sm:$0xff]
      %v294 = vld [vmem:[%s274 + $0x58] sm:$0xff]
      %v295 = vld [vmem:[%s274 + $0x60] sm:$0xff]
      %v296 = vld [vmem:[%s274 + $0x68] sm:$0xff]
      %v297 = vld [vmem:[%s274 + $0x70] sm:$0xff]
      %v298 = vld [vmem:[%s274 + $0x78] sm:$0xff]
      %v299 = vld [vmem:[%s274 + $0x80] sm:$0xff]
      %v300 = vld [vmem:[%s274 + $0x88] sm:$0xff]
      %v301 = vld [vmem:[%s274 + $0x90] sm:$0xff]
      %v302 = vld [vmem:[%s274 + $0x98] sm:$0xff]
      %v303 = vld [vmem:[%s274 + $0xa0] sm:$0xff]
      %v304 = vld [vmem:[%s274 + $0xa8] sm:$0xff]
      %v305 = vld [vmem:[%s274 + $0xb0] sm:$0xff]
      %v306 = vld [vmem:[%s274 + $0xb8] sm:$0xff]
      %v307 = vld [vmem:[%s274 + $0xc0] sm:$0xff]
      %v308 = vld [vmem:[%s274 + $0xc8] sm:$0xff]
      %v309 = vld [vmem:[%s274 + $0xd0] sm:$0xff]
      %v310 = vld [vmem:[%s274 + $0xd8] sm:$0xff]
      %v311 = vld [vmem:[%s274 + $0xe0] sm:$0xff]
      %v312 = vld [vmem:[%s274 + $0xe8] sm:$0xff]
      %v313 = vld [vmem:[%s274 + $0xf0] sm:$0xff]
      %v314 = vld [vmem:[%s274 + $0xf8] sm:$0xff]
      %v315 = vpack.c.bf16 %v284, %v283
      %v316 = vpack.c.bf16 %v286, %v285
      %v317 = vpack.c.bf16 %v288, %v287
      %v318 = vpack.c.bf16 %v290, %v289
      %v319 = vpack.c.bf16 %v292, %v291
      %v320 = vpack.c.bf16 %v294, %v293
      %v321 = vpack.c.bf16 %v296, %v295
      %v322 = vpack.c.bf16 %v298, %v297
      %v323 = vpack.c.bf16 %v300, %v299
      %v324 = vpack.c.bf16 %v302, %v301
      %v325 = vpack.c.bf16 %v304, %v303
      %v326 = vpack.c.bf16 %v306, %v305
      %v327 = vpack.c.bf16 %v308, %v307
      %v328 = vpack.c.bf16 %v310, %v309
      %v329 = vpack.c.bf16 %v312, %v311
      %v330 = vpack.c.bf16 %v314, %v313
      %v331 = vld [vmem:[%s1] sm:$0xf]
      %v332 = vld [vmem:[%s1 + $0x4] sm:$0xf]
      %v333 = vld [vmem:[%s1 + $0x8] sm:$0xf]
      %v334 = vld [vmem:[%s1 + $0xc] sm:$0xf]
      %v335 = vld [vmem:[%s2] sm:$0x1]
      %v337 = vlaneseq
      %v338 = vshrl.u32 %v337, 7
      %v339 = vsub.s32 0, %v338
      %v340 = vrot.slane %v335, %v339
      %v346 = vunpack.c.l.b16 %v331
      %v347 = vunpack.c.l.b16 %v332
      %v348 = vunpack.c.l.b16 %v333
      %v349 = vunpack.c.l.b16 %v334
      %v350 = vpack.c.b16 %v347, %v346
      %v351 = vpack.c.b16 %v349, %v348
      %vm354 = vcmask 261120
      %v356 = vsel %vm354, %v315, 0
      %v359 = vsel %vm354, %v316, 0
      %v362 = vsel %vm354, %v317, 0
      %v365 = vsel %vm354, %v318, 0
      %v368 = vsel %vm354, %v319, 0
      %v371 = vsel %vm354, %v320, 0
      %v374 = vsel %vm354, %v321, 0
      %v377 = vsel %vm354, %v322, 0
      %v380 = vsel %vm354, %v323, 0
      %v383 = vsel %vm354, %v324, 0
      %v386 = vsel %vm354, %v325, 0
      %v389 = vsel %vm354, %v326, 0
      %v392 = vsel %vm354, %v327, 0
      %v395 = vsel %vm354, %v328, 0
      %v398 = vsel %vm354, %v329, 0
      %v401 = vsel %vm354, %v330, 0
      %403 = vmatprep.subr.bf16.mxu0 0
      %404 = vmatpush1.bf16.msra.mxu0 %v350
      %405 = vmatprep.subr.bf16.mxu0 0
      %406 = vmatpush1.bf16.msra.mxu0 %v351
      %407 = vmatprep.subr.bf16.mxu0 0
      %408 = vmatpush1.bf16.msra.mxu0 0
      %409 = vmatprep.subr.bf16.mxu0 0
      %410 = vmatpush1.bf16.msra.mxu0 0
      %411 = vmatprep.subr.bf16.mxu0 0
      %412 = vmatpush1.bf16.msra.mxu0 0
      %413 = vmatprep.subr.bf16.mxu0 0
      %414 = vmatpush1.bf16.msra.mxu0 0
      %415 = vmatprep.subr.bf16.mxu0 0
      %416 = vmatpush1.bf16.msra.mxu0 0
      %417 = vmatprep.subr.bf16.mxu0 0
      %418 = vmatpush1.bf16.msra.mxu0 0
      %419 = vmatprep.subr.bf16.mxu0 0
      %420 = vmatpush1.bf16.msra.mxu0 0
      %421 = vmatprep.subr.bf16.mxu0 0
      %422 = vmatpush1.bf16.msra.mxu0 0
      %423 = vmatprep.subr.bf16.mxu0 0
      %424 = vmatpush1.bf16.msra.mxu0 0
      %425 = vmatprep.subr.bf16.mxu0 0
      %426 = vmatpush1.bf16.msra.mxu0 0
      %427 = vmatprep.subr.bf16.mxu0 0
      %428 = vmatpush1.bf16.msra.mxu0 0
      %429 = vmatprep.subr.bf16.mxu0 0
      %430 = vmatpush1.bf16.msra.mxu0 0
      %431 = vmatprep.subr.bf16.mxu0 0
      %432 = vmatpush1.bf16.msra.mxu0 0
      %433 = vmatprep.subr.bf16.mxu0 0
      %434 = vmatpush1.bf16.msra.mxu0 0
      %435 = vmatprep.mubr.bf16.mxu0 0
      %436 = vmatmul.mubr.bf16.gmra.mrb[0].mxu0 %v356
      %v437 = vpop.f32.mrb[0].mxu0
      %v438 = vadd.f32 %v340, %v437
      %v439 = vpop.f32.mrb[0].mxu0
      %v440 = vpop.f32.mrb[0].mxu0
      %v441 = vadd.f32 %v340, %v440
      %v442 = vpop.f32.mrb[0].mxu0
      %443 = vmatprep.mubr.bf16.mxu0 0
      %444 = vmatmul.mubr.bf16.gmra.mrb[0].mxu0 %v359
      %v445 = vpop.f32.mrb[0].mxu0
      %v446 = vadd.f32 %v340, %v445
      %v447 = vpop.f32.mrb[0].mxu0
      %v448 = vpop.f32.mrb[0].mxu0
      %v449 = vadd.f32 %v340, %v448
      %v450 = vpop.f32.mrb[0].mxu0
      %451 = vmatprep.mubr.bf16.mxu0 0
      %452 = vmatmul.mubr.bf16.gmra.mrb[0].mxu0 %v362
      %v453 = vpop.f32.mrb[0].mxu0
      %v454 = vadd.f32 %v340, %v453
      %v455 = vpop.f32.mrb[0].mxu0
      %v456 = vpop.f32.mrb[0].mxu0
      %v457 = vadd.f32 %v340, %v456
      %v458 = vpop.f32.mrb[0].mxu0
      %459 = vmatprep.mubr.bf16.mxu0 0
      %460 = vmatmul.mubr.bf16.gmra.mrb[0].mxu0 %v365
      %v461 = vpop.f32.mrb[0].mxu0
      %v462 = vadd.f32 %v340, %v461
      %v463 = vpop.f32.mrb[0].mxu0
      %v464 = vpop.f32.mrb[0].mxu0
      %v465 = vadd.f32 %v340, %v464
      %v466 = vpop.f32.mrb[0].mxu0
      %467 = vmatprep.mubr.bf16.mxu0 0
      %468 = vmatmul.mubr.bf16.gmra.mrb[0].mxu0 %v368
      %v469 = vpop.f32.mrb[0].mxu0
      %v470 = vadd.f32 %v340, %v469
      %v471 = vpop.f32.mrb[0].mxu0
      %v472 = vpop.f32.mrb[0].mxu0
      %v473 = vadd.f32 %v340, %v472
      %v474 = vpop.f32.mrb[0].mxu0
      %475 = vmatprep.mubr.bf16.mxu0 0
      %476 = vmatmul.mubr.bf16.gmra.mrb[0].mxu0 %v371
      %v477 = vpop.f32.mrb[0].mxu0
      %v478 = vadd.f32 %v340, %v477
      %v479 = vpop.f32.mrb[0].mxu0
      %v480 = vpop.f32.mrb[0].mxu0
      %v481 = vadd.f32 %v340, %v480
      %v482 = vpop.f32.mrb[0].mxu0
      %483 = vmatprep.mubr.bf16.mxu0 0
      %484 = vmatmul.mubr.bf16.gmra.mrb[0].mxu0 %v374
      %v485 = vpop.f32.mrb[0].mxu0
      %v486 = vadd.f32 %v340, %v485
      %v487 = vpop.f32.mrb[0].mxu0
      %v488 = vpop.f32.mrb[0].mxu0
      %v489 = vadd.f32 %v340, %v488
      %v490 = vpop.f32.mrb[0].mxu0
      %491 = vmatprep.mubr.bf16.mxu0 0
      %492 = vmatmul.mubr.bf16.gmra.mrb[0].mxu0 %v377
      %v493 = vpop.f32.mrb[0].mxu0
      %v494 = vadd.f32 %v340, %v493
      %v495 = vpop.f32.mrb[0].mxu0
      %v496 = vpop.f32.mrb[0].mxu0
      %v497 = vadd.f32 %v340, %v496
      %v498 = vpop.f32.mrb[0].mxu0
      %499 = vmatprep.mubr.bf16.mxu0 0
      %500 = vmatmul.mubr.bf16.gmra.mrb[0].mxu0 %v380
      %v501 = vpop.f32.mrb[0].mxu0
      %v502 = vadd.f32 %v340, %v501
      %v503 = vpop.f32.mrb[0].mxu0
      %v504 = vpop.f32.mrb[0].mxu0
      %v505 = vadd.f32 %v340, %v504
      %v506 = vpop.f32.mrb[0].mxu0
      %507 = vmatprep.mubr.bf16.mxu0 0
      %508 = vmatmul.mubr.bf16.gmra.mrb[0].mxu0 %v383
      %v509 = vpop.f32.mrb[0].mxu0
      %v510 = vadd.f32 %v340, %v509
      %v511 = vpop.f32.mrb[0].mxu0
      %v512 = vpop.f32.mrb[0].mxu0
      %v513 = vadd.f32 %v340, %v512
      %v514 = vpop.f32.mrb[0].mxu0
      %515 = vmatprep.mubr.bf16.mxu0 0
      %516 = vmatmul.mubr.bf16.gmra.mrb[0].mxu0 %v386
      %v517 = vpop.f32.mrb[0].mxu0
      %v518 = vadd.f32 %v340, %v517
      %v519 = vpop.f32.mrb[0].mxu0
      %v520 = vpop.f32.mrb[0].mxu0
      %v521 = vadd.f32 %v340, %v520
      %v522 = vpop.f32.mrb[0].mxu0
      %523 = vmatprep.mubr.bf16.mxu0 0
      %524 = vmatmul.mubr.bf16.gmra.mrb[0].mxu0 %v389
      %v525 = vpop.f32.mrb[0].mxu0
      %v526 = vadd.f32 %v340, %v525
      %v527 = vpop.f32.mrb[0].mxu0
      %v528 = vpop.f32.mrb[0].mxu0
      %v529 = vadd.f32 %v340, %v528
      %v530 = vpop.f32.mrb[0].mxu0
      %531 = vmatprep.mubr.bf16.mxu0 0
      %532 = vmatmul.mubr.bf16.gmra.mrb[0].mxu0 %v392
      %v533 = vpop.f32.mrb[0].mxu0
      %v534 = vadd.f32 %v340, %v533
      %v535 = vpop.f32.mrb[0].mxu0
      %v536 = vpop.f32.mrb[0].mxu0
      %v537 = vadd.f32 %v340, %v536
      %v538 = vpop.f32.mrb[0].mxu0
      %539 = vmatprep.mubr.bf16.mxu0 0
      %540 = vmatmul.mubr.bf16.gmra.mrb[0].mxu0 %v395
      %v541 = vpop.f32.mrb[0].mxu0
      %v542 = vadd.f32 %v340, %v541
      %v543 = vpop.f32.mrb[0].mxu0
      %v544 = vpop.f32.mrb[0].mxu0
      %v545 = vadd.f32 %v340, %v544
      %v546 = vpop.f32.mrb[0].mxu0
      %547 = vmatprep.mubr.bf16.mxu0 0
      %548 = vmatmul.mubr.bf16.gmra.mrb[0].mxu0 %v398
      %v549 = vpop.f32.mrb[0].mxu0
      %v550 = vadd.f32 %v340, %v549
      %v551 = vpop.f32.mrb[0].mxu0
      %v552 = vpop.f32.mrb[0].mxu0
      %v553 = vadd.f32 %v340, %v552
      %v554 = vpop.f32.mrb[0].mxu0
      %555 = vmatprep.mubr.bf16.mxu0 0
      %556 = vmatmul.mubr.bf16.gmra.mrb[0].mxu0 %v401
      %v557 = vpop.f32.mrb[0].mxu0
      %v558 = vadd.f32 %v340, %v557
      %v559 = vpop.f32.mrb[0].mxu0
      %v560 = vpop.f32.mrb[0].mxu0
      %v561 = vadd.f32 %v340, %v560
      %v562 = vpop.f32.mrb[0].mxu0
      %563 = vdwg.mxu0
      %vm564 = vcmp.gt.f32.partialorder %v438, 0.0
      %vm565 = vcmp.gt.f32.partialorder %v441, 0.0
      %vm566 = vcmp.gt.f32.partialorder %v446, 0.0
      %vm567 = vcmp.gt.f32.partialorder %v449, 0.0
      %vm568 = vcmp.gt.f32.partialorder %v454, 0.0
      %vm569 = vcmp.gt.f32.partialorder %v457, 0.0
      %vm570 = vcmp.gt.f32.partialorder %v462, 0.0
      %vm571 = vcmp.gt.f32.partialorder %v465, 0.0
      %vm572 = vcmp.gt.f32.partialorder %v470, 0.0
      %vm573 = vcmp.gt.f32.partialorder %v473, 0.0
      %vm574 = vcmp.gt.f32.partialorder %v478, 0.0
      %vm575 = vcmp.gt.f32.partialorder %v481, 0.0
      %vm576 = vcmp.gt.f32.partialorder %v486, 0.0
      %vm577 = vcmp.gt.f32.partialorder %v489, 0.0
      %vm578 = vcmp.gt.f32.partialorder %v494, 0.0
      %vm579 = vcmp.gt.f32.partialorder %v497, 0.0
      %vm580 = vcmp.gt.f32.partialorder %v502, 0.0
      %vm581 = vcmp.gt.f32.partialorder %v505, 0.0
      %vm582 = vcmp.gt.f32.partialorder %v510, 0.0
      %vm583 = vcmp.gt.f32.partialorder %v513, 0.0
      %vm584 = vcmp.gt.f32.partialorder %v518, 0.0
      %vm585 = vcmp.gt.f32.partialorder %v521, 0.0
      %vm586 = vcmp.gt.f32.partialorder %v526, 0.0
      %vm587 = vcmp.gt.f32.partialorder %v529, 0.0
      %vm588 = vcmp.gt.f32.partialorder %v534, 0.0
      %vm589 = vcmp.gt.f32.partialorder %v537, 0.0
      %vm590 = vcmp.gt.f32.partialorder %v542, 0.0
      %vm591 = vcmp.gt.f32.partialorder %v545, 0.0
      %vm592 = vcmp.gt.f32.partialorder %v550, 0.0
      %vm593 = vcmp.gt.f32.partialorder %v553, 0.0
      %vm594 = vcmp.gt.f32.partialorder %v558, 0.0
      %vm595 = vcmp.gt.f32.partialorder %v561, 0.0
      %v596 = vmin.f32 %v438, 0.0
      %v597 = vmin.f32 %v441, 0.0
      %v598 = vmin.f32 %v446, 0.0
      %v599 = vmin.f32 %v449, 0.0
      %v600 = vmin.f32 %v454, 0.0
      %v601 = vmin.f32 %v457, 0.0
      %v602 = vmin.f32 %v462, 0.0
      %v603 = vmin.f32 %v465, 0.0
      %v604 = vmin.f32 %v470, 0.0
      %v605 = vmin.f32 %v473, 0.0
      %v606 = vmin.f32 %v478, 0.0
      %v607 = vmin.f32 %v481, 0.0
      %v608 = vmin.f32 %v486, 0.0
      %v609 = vmin.f32 %v489, 0.0
      %v610 = vmin.f32 %v494, 0.0
      %v611 = vmin.f32 %v497, 0.0
      %v612 = vmin.f32 %v502, 0.0
      %v613 = vmin.f32 %v505, 0.0
      %v614 = vmin.f32 %v510, 0.0
      %v615 = vmin.f32 %v513, 0.0
      %v616 = vmin.f32 %v518, 0.0
      %v617 = vmin.f32 %v521, 0.0
      %v618 = vmin.f32 %v526, 0.0
      %v619 = vmin.f32 %v529, 0.0
      %v620 = vmin.f32 %v534, 0.0
      %v621 = vmin.f32 %v537, 0.0
      %v622 = vmin.f32 %v542, 0.0
      %v623 = vmin.f32 %v545, 0.0
      %v624 = vmin.f32 %v550, 0.0
      %v625 = vmin.f32 %v553, 0.0
      %v626 = vmin.f32 %v558, 0.0
      %v627 = vmin.f32 %v561, 0.0
      %v628 = vmul.f32 %v596, 1.442695
      %v629 = vpow.pop %v628
      %v630 = vmul.f32 %v597, 1.442695
      %v631 = vpow.pop %v630
      %v632 = vmul.f32 %v598, 1.442695
      %v633 = vpow.pop %v632
      %v634 = vmul.f32 %v599, 1.442695
      %v635 = vpow.pop %v634
      %v636 = vmul.f32 %v600, 1.442695
      %v637 = vpow.pop %v636
      %v638 = vmul.f32 %v601, 1.442695
      %v639 = vpow.pop %v638
      %v640 = vmul.f32 %v602, 1.442695
      %v641 = vpow.pop %v640
      %v642 = vmul.f32 %v603, 1.442695
      %v643 = vpow.pop %v642
      %v644 = vmul.f32 %v604, 1.442695
      %v645 = vpow.pop %v644
      %v646 = vmul.f32 %v605, 1.442695
      %v647 = vpow.pop %v646
      %v648 = vmul.f32 %v606, 1.442695
      %v649 = vpow.pop %v648
      %v650 = vmul.f32 %v607, 1.442695
      %v651 = vpow.pop %v650
      %v652 = vmul.f32 %v608, 1.442695
      %v653 = vpow.pop %v652
      %v654 = vmul.f32 %v609, 1.442695
      %v655 = vpow.pop %v654
      %v656 = vmul.f32 %v610, 1.442695
      %v657 = vpow.pop %v656
      %v658 = vmul.f32 %v611, 1.442695
      %v659 = vpow.pop %v658
      %v660 = vmul.f32 %v612, 1.442695
      %v661 = vpow.pop %v660
      %v662 = vmul.f32 %v613, 1.442695
      %v663 = vpow.pop %v662
      %v664 = vmul.f32 %v614, 1.442695
      %v665 = vpow.pop %v664
      %v666 = vmul.f32 %v615, 1.442695
      %v667 = vpow.pop %v666
      %v668 = vmul.f32 %v616, 1.442695
      %v669 = vpow.pop %v668
      %v670 = vmul.f32 %v617, 1.442695
      %v671 = vpow.pop %v670
      %v672 = vmul.f32 %v618, 1.442695
      %v673 = vpow.pop %v672
      %v674 = vmul.f32 %v619, 1.442695
      %v675 = vpow.pop %v674
      %v676 = vmul.f32 %v620, 1.442695
      %v677 = vpow.pop %v676
      %v678 = vmul.f32 %v621, 1.442695
      %v679 = vpow.pop %v678
      %v680 = vmul.f32 %v622, 1.442695
      %v681 = vpow.pop %v680
      %v682 = vmul.f32 %v623, 1.442695
      %v683 = vpow.pop %v682
      %v684 = vmul.f32 %v624, 1.442695
      %v685 = vpow.pop %v684
      %v686 = vmul.f32 %v625, 1.442695
      %v687 = vpow.pop %v686
      %v688 = vmul.f32 %v626, 1.442695
      %v689 = vpow.pop %v688
      %v690 = vmul.f32 %v627, 1.442695
      %v691 = vpow.pop %v690
      %v692 = vsub.f32 %v629, 1.0
      %v693 = vsub.f32 %v631, 1.0
      %v694 = vsub.f32 %v633, 1.0
      %v695 = vsub.f32 %v635, 1.0
      %v696 = vsub.f32 %v637, 1.0
      %v697 = vsub.f32 %v639, 1.0
      %v698 = vsub.f32 %v641, 1.0
      %v699 = vsub.f32 %v643, 1.0
      %v700 = vsub.f32 %v645, 1.0
      %v701 = vsub.f32 %v647, 1.0
      %v702 = vsub.f32 %v649, 1.0
      %v703 = vsub.f32 %v651, 1.0
      %v704 = vsub.f32 %v653, 1.0
      %v705 = vsub.f32 %v655, 1.0
      %v706 = vsub.f32 %v657, 1.0
      %v707 = vsub.f32 %v659, 1.0
      %v708 = vsub.f32 %v661, 1.0
      %v709 = vsub.f32 %v663, 1.0
      %v710 = vsub.f32 %v665, 1.0
      %v711 = vsub.f32 %v667, 1.0
      %v712 = vsub.f32 %v669, 1.0
      %v713 = vsub.f32 %v671, 1.0
      %v714 = vsub.f32 %v673, 1.0
      %v715 = vsub.f32 %v675, 1.0
      %v716 = vsub.f32 %v677, 1.0
      %v717 = vsub.f32 %v679, 1.0
      %v718 = vsub.f32 %v681, 1.0
      %v719 = vsub.f32 %v683, 1.0
      %v720 = vsub.f32 %v685, 1.0
      %v721 = vsub.f32 %v687, 1.0
      %v722 = vsub.f32 %v689, 1.0
      %v723 = vsub.f32 %v691, 1.0
      %v724 = vsel %vm564, %v438, %v692
      %v725 = vsel %vm565, %v441, %v693
      %v726 = vsel %vm566, %v446, %v694
      %v727 = vsel %vm567, %v449, %v695
      %v728 = vsel %vm568, %v454, %v696
      %v729 = vsel %vm569, %v457, %v697
      %v730 = vsel %vm570, %v462, %v698
      %v731 = vsel %vm571, %v465, %v699
      %v732 = vsel %vm572, %v470, %v700
      %v733 = vsel %vm573, %v473, %v701
      %v734 = vsel %vm574, %v478, %v702
      %v735 = vsel %vm575, %v481, %v703
      %v736 = vsel %vm576, %v486, %v704
      %v737 = vsel %vm577, %v489, %v705
      %v738 = vsel %vm578, %v494, %v706
      %v739 = vsel %vm579, %v497, %v707
      %v740 = vsel %vm580, %v502, %v708
      %v741 = vsel %vm581, %v505, %v709
      %v742 = vsel %vm582, %v510, %v710
      %v743 = vsel %vm583, %v513, %v711
      %v744 = vsel %vm584, %v518, %v712
      %v745 = vsel %vm585, %v521, %v713
      %v746 = vsel %vm586, %v526, %v714
      %v747 = vsel %vm587, %v529, %v715
      %v748 = vsel %vm588, %v534, %v716
      %v749 = vsel %vm589, %v537, %v717
      %v750 = vsel %vm590, %v542, %v718
      %v751 = vsel %vm591, %v545, %v719
      %v752 = vsel %vm592, %v550, %v720
      %v753 = vsel %vm593, %v553, %v721
      %v754 = vsel %vm594, %v558, %v722
      %v755 = vsel %vm595, %v561, %v723
      %v756 = vpack.c.bf16 %v725, %v724
      %v757 = vpack.c.bf16 %v727, %v726
      %v758 = vpack.c.bf16 %v729, %v728
      %v759 = vpack.c.bf16 %v731, %v730
      %v760 = vpack.c.bf16 %v733, %v732
      %v761 = vpack.c.bf16 %v735, %v734
      %v762 = vpack.c.bf16 %v737, %v736
      %v763 = vpack.c.bf16 %v739, %v738
      %v764 = vpack.c.bf16 %v741, %v740
      %v765 = vpack.c.bf16 %v743, %v742
      %v766 = vpack.c.bf16 %v745, %v744
      %v767 = vpack.c.bf16 %v747, %v746
      %v768 = vpack.c.bf16 %v749, %v748
      %v769 = vpack.c.bf16 %v751, %v750
      %v770 = vpack.c.bf16 %v753, %v752
      %v771 = vpack.c.bf16 %v755, %v754
      %v772 = vld [vmem:[%s3] sm:$0xf]
      %v773 = vld [vmem:[%s3 + $0x4] sm:$0xf]
      %v774 = vld [vmem:[%s3 + $0x8] sm:$0xf]
      %v775 = vld [vmem:[%s3 + $0xc] sm:$0xf]
      %v776 = vld [vmem:[%s4] sm:$0x1]
      %v778 = vlaneseq
      %v779 = vshrl.u32 %v778, 7
      %v780 = vsub.s32 0, %v779
      %v781 = vrot.slane %v776, %v780
      %v787 = vunpack.c.l.b16 %v772
      %v788 = vunpack.c.l.b16 %v773
      %v789 = vunpack.c.l.b16 %v774
      %v790 = vunpack.c.l.b16 %v775
      %v791 = vpack.c.b16 %v788, %v787
      %v792 = vpack.c.b16 %v790, %v789
      %v796 = vsel %vm354, %v756, 0
      %v799 = vsel %vm354, %v757, 0
      %v802 = vsel %vm354, %v758, 0
      %v805 = vsel %vm354, %v759, 0
      %v808 = vsel %vm354, %v760, 0
      %v811 = vsel %vm354, %v761, 0
      %v814 = vsel %vm354, %v762, 0
      %v817 = vsel %vm354, %v763, 0
      %v820 = vsel %vm354, %v764, 0
      %v823 = vsel %vm354, %v765, 0
      %v826 = vsel %vm354, %v766, 0
      %v829 = vsel %vm354, %v767, 0
      %v832 = vsel %vm354, %v768, 0
      %v835 = vsel %vm354, %v769, 0
      %v838 = vsel %vm354, %v770, 0
      %v841 = vsel %vm354, %v771, 0
      %843 = vmatprep.subr.bf16.mxu0 0
      %844 = vmatpush1.bf16.msra.mxu0 %v791
      %845 = vmatprep.subr.bf16.mxu0 0
      %846 = vmatpush1.bf16.msra.mxu0 %v792
      %847 = vmatprep.subr.bf16.mxu0 0
      %848 = vmatpush1.bf16.msra.mxu0 0
      %849 = vmatprep.subr.bf16.mxu0 0
      %850 = vmatpush1.bf16.msra.mxu0 0
      %851 = vmatprep.subr.bf16.mxu0 0
      %852 = vmatpush1.bf16.msra.mxu0 0
      %853 = vmatprep.subr.bf16.mxu0 0
      %854 = vmatpush1.bf16.msra.mxu0 0
      %855 = vmatprep.subr.bf16.mxu0 0
      %856 = vmatpush1.bf16.msra.mxu0 0
      %857 = vmatprep.subr.bf16.mxu0 0
      %858 = vmatpush1.bf16.msra.mxu0 0
      %859 = vmatprep.subr.bf16.mxu0 0
      %860 = vmatpush1.bf16.msra.mxu0 0
      %861 = vmatprep.subr.bf16.mxu0 0
      %862 = vmatpush1.bf16.msra.mxu0 0
      %863 = vmatprep.subr.bf16.mxu0 0
      %864 = vmatpush1.bf16.msra.mxu0 0
      %865 = vmatprep.subr.bf16.mxu0 0
      %866 = vmatpush1.bf16.msra.mxu0 0
      %867 = vmatprep.subr.bf16.mxu0 0
      %868 = vmatpush1.bf16.msra.mxu0 0
      %869 = vmatprep.subr.bf16.mxu0 0
      %870 = vmatpush1.bf16.msra.mxu0 0
      %871 = vmatprep.subr.bf16.mxu0 0
      %872 = vmatpush1.bf16.msra.mxu0 0
      %873 = vmatprep.subr.bf16.mxu0 0
      %874 = vmatpush1.bf16.msra.mxu0 0
      %875 = vmatprep.mubr.bf16.mxu0 0
      %876 = vmatmul.mubr.bf16.gmra.mrb[0].mxu0 %v796
      %v877 = vpop.f32.mrb[0].mxu0
      %v878 = vadd.f32 %v781, %v877
      %v879 = vpop.f32.mrb[0].mxu0
      %v880 = vpop.f32.mrb[0].mxu0
      %v881 = vadd.f32 %v781, %v880
      %v882 = vpop.f32.mrb[0].mxu0
      %883 = vmatprep.mubr.bf16.mxu0 0
      %884 = vmatmul.mubr.bf16.gmra.mrb[0].mxu0 %v799
      %v885 = vpop.f32.mrb[0].mxu0
      %v886 = vadd.f32 %v781, %v885
      %v887 = vpop.f32.mrb[0].mxu0
      %v888 = vpop.f32.mrb[0].mxu0
      %v889 = vadd.f32 %v781, %v888
      %v890 = vpop.f32.mrb[0].mxu0
      %891 = vmatprep.mubr.bf16.mxu0 0
      %892 = vmatmul.mubr.bf16.gmra.mrb[0].mxu0 %v802
      %v893 = vpop.f32.mrb[0].mxu0
      %v894 = vadd.f32 %v781, %v893
      %v895 = vpop.f32.mrb[0].mxu0
      %v896 = vpop.f32.mrb[0].mxu0
      %v897 = vadd.f32 %v781, %v896
      %v898 = vpop.f32.mrb[0].mxu0
      %899 = vmatprep.mubr.bf16.mxu0 0
      %900 = vmatmul.mubr.bf16.gmra.mrb[0].mxu0 %v805
      %v901 = vpop.f32.mrb[0].mxu0
      %v902 = vadd.f32 %v781, %v901
      %v903 = vpop.f32.mrb[0].mxu0
      %v904 = vpop.f32.mrb[0].mxu0
      %v905 = vadd.f32 %v781, %v904
      %v906 = vpop.f32.mrb[0].mxu0
      %907 = vmatprep.mubr.bf16.mxu0 0
      %908 = vmatmul.mubr.bf16.gmra.mrb[0].mxu0 %v808
      %v909 = vpop.f32.mrb[0].mxu0
      %v910 = vadd.f32 %v781, %v909
      %v911 = vpop.f32.mrb[0].mxu0
      %v912 = vpop.f32.mrb[0].mxu0
      %v913 = vadd.f32 %v781, %v912
      %v914 = vpop.f32.mrb[0].mxu0
      %915 = vmatprep.mubr.bf16.mxu0 0
      %916 = vmatmul.mubr.bf16.gmra.mrb[0].mxu0 %v811
      %v917 = vpop.f32.mrb[0].mxu0
      %v918 = vadd.f32 %v781, %v917
      %v919 = vpop.f32.mrb[0].mxu0
      %v920 = vpop.f32.mrb[0].mxu0
      %v921 = vadd.f32 %v781, %v920
      %v922 = vpop.f32.mrb[0].mxu0
      %923 = vmatprep.mubr.bf16.mxu0 0
      %924 = vmatmul.mubr.bf16.gmra.mrb[0].mxu0 %v814
      %v925 = vpop.f32.mrb[0].mxu0
      %v926 = vadd.f32 %v781, %v925
      %v927 = vpop.f32.mrb[0].mxu0
      %v928 = vpop.f32.mrb[0].mxu0
      %v929 = vadd.f32 %v781, %v928
      %v930 = vpop.f32.mrb[0].mxu0
      %931 = vmatprep.mubr.bf16.mxu0 0
      %932 = vmatmul.mubr.bf16.gmra.mrb[0].mxu0 %v817
      %v933 = vpop.f32.mrb[0].mxu0
      %v934 = vadd.f32 %v781, %v933
      %v935 = vpop.f32.mrb[0].mxu0
      %v936 = vpop.f32.mrb[0].mxu0
      %v937 = vadd.f32 %v781, %v936
      %v938 = vpop.f32.mrb[0].mxu0
      %939 = vmatprep.mubr.bf16.mxu0 0
      %940 = vmatmul.mubr.bf16.gmra.mrb[0].mxu0 %v820
      %v941 = vpop.f32.mrb[0].mxu0
      %v942 = vadd.f32 %v781, %v941
      %v943 = vpop.f32.mrb[0].mxu0
      %v944 = vpop.f32.mrb[0].mxu0
      %v945 = vadd.f32 %v781, %v944
      %v946 = vpop.f32.mrb[0].mxu0
      %947 = vmatprep.mubr.bf16.mxu0 0
      %948 = vmatmul.mubr.bf16.gmra.mrb[0].mxu0 %v823
      %v949 = vpop.f32.mrb[0].mxu0
      %v950 = vadd.f32 %v781, %v949
      %v951 = vpop.f32.mrb[0].mxu0
      %v952 = vpop.f32.mrb[0].mxu0
      %v953 = vadd.f32 %v781, %v952
      %v954 = vpop.f32.mrb[0].mxu0
      %955 = vmatprep.mubr.bf16.mxu0 0
      %956 = vmatmul.mubr.bf16.gmra.mrb[0].mxu0 %v826
      %v957 = vpop.f32.mrb[0].mxu0
      %v958 = vadd.f32 %v781, %v957
      %v959 = vpop.f32.mrb[0].mxu0
      %v960 = vpop.f32.mrb[0].mxu0
      %v961 = vadd.f32 %v781, %v960
      %v962 = vpop.f32.mrb[0].mxu0
      %963 = vmatprep.mubr.bf16.mxu0 0
      %964 = vmatmul.mubr.bf16.gmra.mrb[0].mxu0 %v829
      %v965 = vpop.f32.mrb[0].mxu0
      %v966 = vadd.f32 %v781, %v965
      %v967 = vpop.f32.mrb[0].mxu0
      %v968 = vpop.f32.mrb[0].mxu0
      %v969 = vadd.f32 %v781, %v968
      %v970 = vpop.f32.mrb[0].mxu0
      %971 = vmatprep.mubr.bf16.mxu0 0
      %972 = vmatmul.mubr.bf16.gmra.mrb[0].mxu0 %v832
      %v973 = vpop.f32.mrb[0].mxu0
      %v974 = vadd.f32 %v781, %v973
      %v975 = vpop.f32.mrb[0].mxu0
      %v976 = vpop.f32.mrb[0].mxu0
      %v977 = vadd.f32 %v781, %v976
      %v978 = vpop.f32.mrb[0].mxu0
      %979 = vmatprep.mubr.bf16.mxu0 0
      %980 = vmatmul.mubr.bf16.gmra.mrb[0].mxu0 %v835
      %v981 = vpop.f32.mrb[0].mxu0
      %v982 = vadd.f32 %v781, %v981
      %v983 = vpop.f32.mrb[0].mxu0
      %v984 = vpop.f32.mrb[0].mxu0
      %v985 = vadd.f32 %v781, %v984
      %v986 = vpop.f32.mrb[0].mxu0
      %987 = vmatprep.mubr.bf16.mxu0 0
      %988 = vmatmul.mubr.bf16.gmra.mrb[0].mxu0 %v838
      %v989 = vpop.f32.mrb[0].mxu0
      %v990 = vadd.f32 %v781, %v989
      %v991 = vpop.f32.mrb[0].mxu0
      %v992 = vpop.f32.mrb[0].mxu0
      %v993 = vadd.f32 %v781, %v992
      %v994 = vpop.f32.mrb[0].mxu0
      %995 = vmatprep.mubr.bf16.mxu0 0
      %996 = vmatmul.mubr.bf16.gmra.mrb[0].mxu0 %v841
      %v997 = vpop.f32.mrb[0].mxu0
      %v998 = vadd.f32 %v781, %v997
      %v999 = vpop.f32.mrb[0].mxu0
      %v1000 = vpop.f32.mrb[0].mxu0
      %v1001 = vadd.f32 %v781, %v1000
      %v1002 = vpop.f32.mrb[0].mxu0
      %1003 = vdwg.mxu0
      %vm1004 = vcmp.gt.f32.partialorder %v878, 0.0
      %vm1005 = vcmp.gt.f32.partialorder %v881, 0.0
      %vm1006 = vcmp.gt.f32.partialorder %v886, 0.0
      %vm1007 = vcmp.gt.f32.partialorder %v889, 0.0
      %vm1008 = vcmp.gt.f32.partialorder %v894, 0.0
      %vm1009 = vcmp.gt.f32.partialorder %v897, 0.0
      %vm1010 = vcmp.gt.f32.partialorder %v902, 0.0
      %vm1011 = vcmp.gt.f32.partialorder %v905, 0.0
      %vm1012 = vcmp.gt.f32.partialorder %v910, 0.0
      %vm1013 = vcmp.gt.f32.partialorder %v913, 0.0
      %vm1014 = vcmp.gt.f32.partialorder %v918, 0.0
      %vm1015 = vcmp.gt.f32.partialorder %v921, 0.0
      %vm1016 = vcmp.gt.f32.partialorder %v926, 0.0
      %vm1017 = vcmp.gt.f32.partialorder %v929, 0.0
      %vm1018 = vcmp.gt.f32.partialorder %v934, 0.0
      %vm1019 = vcmp.gt.f32.partialorder %v937, 0.0
      %vm1020 = vcmp.gt.f32.partialorder %v942, 0.0
      %vm1021 = vcmp.gt.f32.partialorder %v945, 0.0
      %vm1022 = vcmp.gt.f32.partialorder %v950, 0.0
      %vm1023 = vcmp.gt.f32.partialorder %v953, 0.0
      %vm1024 = vcmp.gt.f32.partialorder %v958, 0.0
      %vm1025 = vcmp.gt.f32.partialorder %v961, 0.0
      %vm1026 = vcmp.gt.f32.partialorder %v966, 0.0
      %vm1027 = vcmp.gt.f32.partialorder %v969, 0.0
      %vm1028 = vcmp.gt.f32.partialorder %v974, 0.0
      %vm1029 = vcmp.gt.f32.partialorder %v977, 0.0
      %vm1030 = vcmp.gt.f32.partialorder %v982, 0.0
      %vm1031 = vcmp.gt.f32.partialorder %v985, 0.0
      %vm1032 = vcmp.gt.f32.partialorder %v990, 0.0
      %vm1033 = vcmp.gt.f32.partialorder %v993, 0.0
      %vm1034 = vcmp.gt.f32.partialorder %v998, 0.0
      %vm1035 = vcmp.gt.f32.partialorder %v1001, 0.0
      %v1036 = vmin.f32 %v878, 0.0
      %v1037 = vmin.f32 %v881, 0.0
      %v1038 = vmin.f32 %v886, 0.0
      %v1039 = vmin.f32 %v889, 0.0
      %v1040 = vmin.f32 %v894, 0.0
      %v1041 = vmin.f32 %v897, 0.0
      %v1042 = vmin.f32 %v902, 0.0
      %v1043 = vmin.f32 %v905, 0.0
      %v1044 = vmin.f32 %v910, 0.0
      %v1045 = vmin.f32 %v913, 0.0
      %v1046 = vmin.f32 %v918, 0.0
      %v1047 = vmin.f32 %v921, 0.0
      %v1048 = vmin.f32 %v926, 0.0
      %v1049 = vmin.f32 %v929, 0.0
      %v1050 = vmin.f32 %v934, 0.0
      %v1051 = vmin.f32 %v937, 0.0
      %v1052 = vmin.f32 %v942, 0.0
      %v1053 = vmin.f32 %v945, 0.0
      %v1054 = vmin.f32 %v950, 0.0
      %v1055 = vmin.f32 %v953, 0.0
      %v1056 = vmin.f32 %v958, 0.0
      %v1057 = vmin.f32 %v961, 0.0
      %v1058 = vmin.f32 %v966, 0.0
      %v1059 = vmin.f32 %v969, 0.0
      %v1060 = vmin.f32 %v974, 0.0
      %v1061 = vmin.f32 %v977, 0.0
      %v1062 = vmin.f32 %v982, 0.0
      %v1063 = vmin.f32 %v985, 0.0
      %v1064 = vmin.f32 %v990, 0.0
      %v1065 = vmin.f32 %v993, 0.0
      %v1066 = vmin.f32 %v998, 0.0
      %v1067 = vmin.f32 %v1001, 0.0
      %v1068 = vmul.f32 %v1036, 1.442695
      %v1069 = vpow.pop %v1068
      %v1070 = vmul.f32 %v1037, 1.442695
      %v1071 = vpow.pop %v1070
      %v1072 = vmul.f32 %v1038, 1.442695
      %v1073 = vpow.pop %v1072
      %v1074 = vmul.f32 %v1039, 1.442695
      %v1075 = vpow.pop %v1074
      %v1076 = vmul.f32 %v1040, 1.442695
      %v1077 = vpow.pop %v1076
      %v1078 = vmul.f32 %v1041, 1.442695
      %v1079 = vpow.pop %v1078
      %v1080 = vmul.f32 %v1042, 1.442695
      %v1081 = vpow.pop %v1080
      %v1082 = vmul.f32 %v1043, 1.442695
      %v1083 = vpow.pop %v1082
      %v1084 = vmul.f32 %v1044, 1.442695
      %v1085 = vpow.pop %v1084
      %v1086 = vmul.f32 %v1045, 1.442695
      %v1087 = vpow.pop %v1086
      %v1088 = vmul.f32 %v1046, 1.442695
      %v1089 = vpow.pop %v1088
      %v1090 = vmul.f32 %v1047, 1.442695
      %v1091 = vpow.pop %v1090
      %v1092 = vmul.f32 %v1048, 1.442695
      %v1093 = vpow.pop %v1092
      %v1094 = vmul.f32 %v1049, 1.442695
      %v1095 = vpow.pop %v1094
      %v1096 = vmul.f32 %v1050, 1.442695
      %v1097 = vpow.pop %v1096
      %v1098 = vmul.f32 %v1051, 1.442695
      %v1099 = vpow.pop %v1098
      %v1100 = vmul.f32 %v1052, 1.442695
      %v1101 = vpow.pop %v1100
      %v1102 = vmul.f32 %v1053, 1.442695
      %v1103 = vpow.pop %v1102
      %v1104 = vmul.f32 %v1054, 1.442695
      %v1105 = vpow.pop %v1104
      %v1106 = vmul.f32 %v1055, 1.442695
      %v1107 = vpow.pop %v1106
      %v1108 = vmul.f32 %v1056, 1.442695
      %v1109 = vpow.pop %v1108
      %v1110 = vmul.f32 %v1057, 1.442695
      %v1111 = vpow.pop %v1110
      %v1112 = vmul.f32 %v1058, 1.442695
      %v1113 = vpow.pop %v1112
      %v1114 = vmul.f32 %v1059, 1.442695
      %v1115 = vpow.pop %v1114
      %v1116 = vmul.f32 %v1060, 1.442695
      %v1117 = vpow.pop %v1116
      %v1118 = vmul.f32 %v1061, 1.442695
      %v1119 = vpow.pop %v1118
      %v1120 = vmul.f32 %v1062, 1.442695
      %v1121 = vpow.pop %v1120
      %v1122 = vmul.f32 %v1063, 1.442695
      %v1123 = vpow.pop %v1122
      %v1124 = vmul.f32 %v1064, 1.442695
      %v1125 = vpow.pop %v1124
      %v1126 = vmul.f32 %v1065, 1.442695
      %v1127 = vpow.pop %v1126
      %v1128 = vmul.f32 %v1066, 1.442695
      %v1129 = vpow.pop %v1128
      %v1130 = vmul.f32 %v1067, 1.442695
      %v1131 = vpow.pop %v1130
      %v1132 = vsub.f32 %v1069, 1.0
      %v1133 = vsub.f32 %v1071, 1.0
      %v1134 = vsub.f32 %v1073, 1.0
      %v1135 = vsub.f32 %v1075, 1.0
      %v1136 = vsub.f32 %v1077, 1.0
      %v1137 = vsub.f32 %v1079, 1.0
      %v1138 = vsub.f32 %v1081, 1.0
      %v1139 = vsub.f32 %v1083, 1.0
      %v1140 = vsub.f32 %v1085, 1.0
      %v1141 = vsub.f32 %v1087, 1.0
      %v1142 = vsub.f32 %v1089, 1.0
      %v1143 = vsub.f32 %v1091, 1.0
      %v1144 = vsub.f32 %v1093, 1.0
      %v1145 = vsub.f32 %v1095, 1.0
      %v1146 = vsub.f32 %v1097, 1.0
      %v1147 = vsub.f32 %v1099, 1.0
      %v1148 = vsub.f32 %v1101, 1.0
      %v1149 = vsub.f32 %v1103, 1.0
      %v1150 = vsub.f32 %v1105, 1.0
      %v1151 = vsub.f32 %v1107, 1.0
      %v1152 = vsub.f32 %v1109, 1.0
      %v1153 = vsub.f32 %v1111, 1.0
      %v1154 = vsub.f32 %v1113, 1.0
      %v1155 = vsub.f32 %v1115, 1.0
      %v1156 = vsub.f32 %v1117, 1.0
      %v1157 = vsub.f32 %v1119, 1.0
      %v1158 = vsub.f32 %v1121, 1.0
      %v1159 = vsub.f32 %v1123, 1.0
      %v1160 = vsub.f32 %v1125, 1.0
      %v1161 = vsub.f32 %v1127, 1.0
      %v1162 = vsub.f32 %v1129, 1.0
      %v1163 = vsub.f32 %v1131, 1.0
      %v1164 = vsel %vm1004, %v878, %v1132
      %v1165 = vsel %vm1005, %v881, %v1133
      %v1166 = vsel %vm1006, %v886, %v1134
      %v1167 = vsel %vm1007, %v889, %v1135
      %v1168 = vsel %vm1008, %v894, %v1136
      %v1169 = vsel %vm1009, %v897, %v1137
      %v1170 = vsel %vm1010, %v902, %v1138
      %v1171 = vsel %vm1011, %v905, %v1139
      %v1172 = vsel %vm1012, %v910, %v1140
      %v1173 = vsel %vm1013, %v913, %v1141
      %v1174 = vsel %vm1014, %v918, %v1142
      %v1175 = vsel %vm1015, %v921, %v1143
      %v1176 = vsel %vm1016, %v926, %v1144
      %v1177 = vsel %vm1017, %v929, %v1145
      %v1178 = vsel %vm1018, %v934, %v1146
      %v1179 = vsel %vm1019, %v937, %v1147
      %v1180 = vsel %vm1020, %v942, %v1148
      %v1181 = vsel %vm1021, %v945, %v1149
      %v1182 = vsel %vm1022, %v950, %v1150
      %v1183 = vsel %vm1023, %v953, %v1151
      %v1184 = vsel %vm1024, %v958, %v1152
      %v1185 = vsel %vm1025, %v961, %v1153
      %v1186 = vsel %vm1026, %v966, %v1154
      %v1187 = vsel %vm1027, %v969, %v1155
      %v1188 = vsel %vm1028, %v974, %v1156
      %v1189 = vsel %vm1029, %v977, %v1157
      %v1190 = vsel %vm1030, %v982, %v1158
      %v1191 = vsel %vm1031, %v985, %v1159
      %v1192 = vsel %vm1032, %v990, %v1160
      %v1193 = vsel %vm1033, %v993, %v1161
      %v1194 = vsel %vm1034, %v998, %v1162
      %v1195 = vsel %vm1035, %v1001, %v1163
      %v1196 = vpack.c.bf16 %v1165, %v1164
      %v1197 = vpack.c.bf16 %v1167, %v1166
      %v1198 = vpack.c.bf16 %v1169, %v1168
      %v1199 = vpack.c.bf16 %v1171, %v1170
      %v1200 = vpack.c.bf16 %v1173, %v1172
      %v1201 = vpack.c.bf16 %v1175, %v1174
      %v1202 = vpack.c.bf16 %v1177, %v1176
      %v1203 = vpack.c.bf16 %v1179, %v1178
      %v1204 = vpack.c.bf16 %v1181, %v1180
      %v1205 = vpack.c.bf16 %v1183, %v1182
      %v1206 = vpack.c.bf16 %v1185, %v1184
      %v1207 = vpack.c.bf16 %v1187, %v1186
      %v1208 = vpack.c.bf16 %v1189, %v1188
      %v1209 = vpack.c.bf16 %v1191, %v1190
      %v1210 = vpack.c.bf16 %v1193, %v1192
      %v1211 = vpack.c.bf16 %v1195, %v1194
      %v1212 = vld [vmem:[%s5] sm:$0xf]
      %v1213 = vld [vmem:[%s5 + $0x4] sm:$0xf]
      %v1214 = vld [vmem:[%s5 + $0x8] sm:$0xf]
      %v1215 = vld [vmem:[%s5 + $0xc] sm:$0xf]
      %v1216 = vld [vmem:[%s6] sm:$0x1]
      %v1218 = vlaneseq
      %v1219 = vshrl.u32 %v1218, 7
      %v1220 = vsub.s32 0, %v1219
      %v1221 = vrot.slane %v1216, %v1220
      %v1227 = vunpack.c.l.b16 %v1212
      %v1228 = vunpack.c.l.b16 %v1213
      %v1229 = vunpack.c.l.b16 %v1214
      %v1230 = vunpack.c.l.b16 %v1215
      %v1231 = vpack.c.b16 %v1228, %v1227
      %v1232 = vpack.c.b16 %v1230, %v1229
      %v1236 = vsel %vm354, %v1196, 0
      %v1239 = vsel %vm354, %v1197, 0
      %v1242 = vsel %vm354, %v1198, 0
      %v1245 = vsel %vm354, %v1199, 0
      %v1248 = vsel %vm354, %v1200, 0
      %v1251 = vsel %vm354, %v1201, 0
      %v1254 = vsel %vm354, %v1202, 0
      %v1257 = vsel %vm354, %v1203, 0
      %v1260 = vsel %vm354, %v1204, 0
      %v1263 = vsel %vm354, %v1205, 0
      %v1266 = vsel %vm354, %v1206, 0
      %v1269 = vsel %vm354, %v1207, 0
      %v1272 = vsel %vm354, %v1208, 0
      %v1275 = vsel %vm354, %v1209, 0
      %v1278 = vsel %vm354, %v1210, 0
      %v1281 = vsel %vm354, %v1211, 0
      %1283 = vmatprep.subr.bf16.mxu0 0
      %1284 = vmatpush1.bf16.msra.mxu0 %v1231
      %1285 = vmatprep.subr.bf16.mxu0 0
      %1286 = vmatpush1.bf16.msra.mxu0 %v1232
      %1287 = vmatprep.subr.bf16.mxu0 0
      %1288 = vmatpush1.bf16.msra.mxu0 0
      %1289 = vmatprep.subr.bf16.mxu0 0
      %1290 = vmatpush1.bf16.msra.mxu0 0
      %1291 = vmatprep.subr.bf16.mxu0 0
      %1292 = vmatpush1.bf16.msra.mxu0 0
      %1293 = vmatprep.subr.bf16.mxu0 0
      %1294 = vmatpush1.bf16.msra.mxu0 0
      %1295 = vmatprep.subr.bf16.mxu0 0
      %1296 = vmatpush1.bf16.msra.mxu0 0
      %1297 = vmatprep.subr.bf16.mxu0 0
      %1298 = vmatpush1.bf16.msra.mxu0 0
      %1299 = vmatprep.subr.bf16.mxu0 0
      %1300 = vmatpush1.bf16.msra.mxu0 0
      %1301 = vmatprep.subr.bf16.mxu0 0
      %1302 = vmatpush1.bf16.msra.mxu0 0
      %1303 = vmatprep.subr.bf16.mxu0 0
      %1304 = vmatpush1.bf16.msra.mxu0 0
      %1305 = vmatprep.subr.bf16.mxu0 0
      %1306 = vmatpush1.bf16.msra.mxu0 0
      %1307 = vmatprep.subr.bf16.mxu0 0
      %1308 = vmatpush1.bf16.msra.mxu0 0
      %1309 = vmatprep.subr.bf16.mxu0 0
      %1310 = vmatpush1.bf16.msra.mxu0 0
      %1311 = vmatprep.subr.bf16.mxu0 0
      %1312 = vmatpush1.bf16.msra.mxu0 0
      %1313 = vmatprep.subr.bf16.mxu0 0
      %1314 = vmatpush1.bf16.msra.mxu0 0
      %1315 = vmatprep.mubr.bf16.mxu0 0
      %1316 = vmatmul.mubr.bf16.gmra.mrb[0].mxu0 %v1236
      %v1317 = vpop.f32.mrb[0].mxu0
      %v1318 = vadd.f32 %v1221, %v1317
      %v1319 = vpop.f32.mrb[0].mxu0
      %v1320 = vpop.f32.mrb[0].mxu0
      %v1321 = vadd.f32 %v1221, %v1320
      %v1322 = vpop.f32.mrb[0].mxu0
      %1323 = vmatprep.mubr.bf16.mxu0 0
      %1324 = vmatmul.mubr.bf16.gmra.mrb[0].mxu0 %v1239
      %v1325 = vpop.f32.mrb[0].mxu0
      %v1326 = vadd.f32 %v1221, %v1325
      %v1327 = vpop.f32.mrb[0].mxu0
      %v1328 = vpop.f32.mrb[0].mxu0
      %v1329 = vadd.f32 %v1221, %v1328
      %v1330 = vpop.f32.mrb[0].mxu0
      %1331 = vmatprep.mubr.bf16.mxu0 0
      %1332 = vmatmul.mubr.bf16.gmra.mrb[0].mxu0 %v1242
      %v1333 = vpop.f32.mrb[0].mxu0
      %v1334 = vadd.f32 %v1221, %v1333
      %v1335 = vpop.f32.mrb[0].mxu0
      %v1336 = vpop.f32.mrb[0].mxu0
      %v1337 = vadd.f32 %v1221, %v1336
      %v1338 = vpop.f32.mrb[0].mxu0
      %1339 = vmatprep.mubr.bf16.mxu0 0
      %1340 = vmatmul.mubr.bf16.gmra.mrb[0].mxu0 %v1245
      %v1341 = vpop.f32.mrb[0].mxu0
      %v1342 = vadd.f32 %v1221, %v1341
      %v1343 = vpop.f32.mrb[0].mxu0
      %v1344 = vpop.f32.mrb[0].mxu0
      %v1345 = vadd.f32 %v1221, %v1344
      %v1346 = vpop.f32.mrb[0].mxu0
      %1347 = vmatprep.mubr.bf16.mxu0 0
      %1348 = vmatmul.mubr.bf16.gmra.mrb[0].mxu0 %v1248
      %v1349 = vpop.f32.mrb[0].mxu0
      %v1350 = vadd.f32 %v1221, %v1349
      %v1351 = vpop.f32.mrb[0].mxu0
      %v1352 = vpop.f32.mrb[0].mxu0
      %v1353 = vadd.f32 %v1221, %v1352
      %v1354 = vpop.f32.mrb[0].mxu0
      %1355 = vmatprep.mubr.bf16.mxu0 0
      %1356 = vmatmul.mubr.bf16.gmra.mrb[0].mxu0 %v1251
      %v1357 = vpop.f32.mrb[0].mxu0
      %v1358 = vadd.f32 %v1221, %v1357
      %v1359 = vpop.f32.mrb[0].mxu0
      %v1360 = vpop.f32.mrb[0].mxu0
      %v1361 = vadd.f32 %v1221, %v1360
      %v1362 = vpop.f32.mrb[0].mxu0
      %1363 = vmatprep.mubr.bf16.mxu0 0
      %1364 = vmatmul.mubr.bf16.gmra.mrb[0].mxu0 %v1254
      %v1365 = vpop.f32.mrb[0].mxu0
      %v1366 = vadd.f32 %v1221, %v1365
      %v1367 = vpop.f32.mrb[0].mxu0
      %v1368 = vpop.f32.mrb[0].mxu0
      %v1369 = vadd.f32 %v1221, %v1368
      %v1370 = vpop.f32.mrb[0].mxu0
      %1371 = vmatprep.mubr.bf16.mxu0 0
      %1372 = vmatmul.mubr.bf16.gmra.mrb[0].mxu0 %v1257
      %v1373 = vpop.f32.mrb[0].mxu0
      %v1374 = vadd.f32 %v1221, %v1373
      %v1375 = vpop.f32.mrb[0].mxu0
      %v1376 = vpop.f32.mrb[0].mxu0
      %v1377 = vadd.f32 %v1221, %v1376
      %v1378 = vpop.f32.mrb[0].mxu0
      %1379 = vmatprep.mubr.bf16.mxu0 0
      %1380 = vmatmul.mubr.bf16.gmra.mrb[0].mxu0 %v1260
      %v1381 = vpop.f32.mrb[0].mxu0
      %v1382 = vadd.f32 %v1221, %v1381
      %v1383 = vpop.f32.mrb[0].mxu0
      %v1384 = vpop.f32.mrb[0].mxu0
      %v1385 = vadd.f32 %v1221, %v1384
      %v1386 = vpop.f32.mrb[0].mxu0
      %1387 = vmatprep.mubr.bf16.mxu0 0
      %1388 = vmatmul.mubr.bf16.gmra.mrb[0].mxu0 %v1263
      %v1389 = vpop.f32.mrb[0].mxu0
      %v1390 = vadd.f32 %v1221, %v1389
      %v1391 = vpop.f32.mrb[0].mxu0
      %v1392 = vpop.f32.mrb[0].mxu0
      %v1393 = vadd.f32 %v1221, %v1392
      %v1394 = vpop.f32.mrb[0].mxu0
      %1395 = vmatprep.mubr.bf16.mxu0 0
      %1396 = vmatmul.mubr.bf16.gmra.mrb[0].mxu0 %v1266
      %v1397 = vpop.f32.mrb[0].mxu0
      %v1398 = vadd.f32 %v1221, %v1397
      %v1399 = vpop.f32.mrb[0].mxu0
      %v1400 = vpop.f32.mrb[0].mxu0
      %v1401 = vadd.f32 %v1221, %v1400
      %v1402 = vpop.f32.mrb[0].mxu0
      %1403 = vmatprep.mubr.bf16.mxu0 0
      %1404 = vmatmul.mubr.bf16.gmra.mrb[0].mxu0 %v1269
      %v1405 = vpop.f32.mrb[0].mxu0
      %v1406 = vadd.f32 %v1221, %v1405
      %v1407 = vpop.f32.mrb[0].mxu0
      %v1408 = vpop.f32.mrb[0].mxu0
      %v1409 = vadd.f32 %v1221, %v1408
      %v1410 = vpop.f32.mrb[0].mxu0
      %1411 = vmatprep.mubr.bf16.mxu0 0
      %1412 = vmatmul.mubr.bf16.gmra.mrb[0].mxu0 %v1272
      %v1413 = vpop.f32.mrb[0].mxu0
      %v1414 = vadd.f32 %v1221, %v1413
      %v1415 = vpop.f32.mrb[0].mxu0
      %v1416 = vpop.f32.mrb[0].mxu0
      %v1417 = vadd.f32 %v1221, %v1416
      %v1418 = vpop.f32.mrb[0].mxu0
      %1419 = vmatprep.mubr.bf16.mxu0 0
      %1420 = vmatmul.mubr.bf16.gmra.mrb[0].mxu0 %v1275
      %v1421 = vpop.f32.mrb[0].mxu0
      %v1422 = vadd.f32 %v1221, %v1421
      %v1423 = vpop.f32.mrb[0].mxu0
      %v1424 = vpop.f32.mrb[0].mxu0
      %v1425 = vadd.f32 %v1221, %v1424
      %v1426 = vpop.f32.mrb[0].mxu0
      %1427 = vmatprep.mubr.bf16.mxu0 0
      %1428 = vmatmul.mubr.bf16.gmra.mrb[0].mxu0 %v1278
      %v1429 = vpop.f32.mrb[0].mxu0
      %v1430 = vadd.f32 %v1221, %v1429
      %v1431 = vpop.f32.mrb[0].mxu0
      %v1432 = vpop.f32.mrb[0].mxu0
      %v1433 = vadd.f32 %v1221, %v1432
      %v1434 = vpop.f32.mrb[0].mxu0
      %1435 = vmatprep.mubr.bf16.mxu0 0
      %1436 = vmatmul.mubr.bf16.gmra.mrb[0].mxu0 %v1281
      %v1437 = vpop.f32.mrb[0].mxu0
      %v1438 = vadd.f32 %v1221, %v1437
      %v1439 = vpop.f32.mrb[0].mxu0
      %v1440 = vpop.f32.mrb[0].mxu0
      %v1441 = vadd.f32 %v1221, %v1440
      %v1442 = vpop.f32.mrb[0].mxu0
      %1443 = vdwg.mxu0
      %v1444 = vsub.f32 0.0, %v1318
      %v1445 = vsub.f32 0.0, %v1321
      %v1446 = vsub.f32 0.0, %v1326
      %v1447 = vsub.f32 0.0, %v1329
      %v1448 = vsub.f32 0.0, %v1334
      %v1449 = vsub.f32 0.0, %v1337
      %v1450 = vsub.f32 0.0, %v1342
      %v1451 = vsub.f32 0.0, %v1345
      %v1452 = vsub.f32 0.0, %v1350
      %v1453 = vsub.f32 0.0, %v1353
      %v1454 = vsub.f32 0.0, %v1358
      %v1455 = vsub.f32 0.0, %v1361
      %v1456 = vsub.f32 0.0, %v1366
      %v1457 = vsub.f32 0.0, %v1369
      %v1458 = vsub.f32 0.0, %v1374
      %v1459 = vsub.f32 0.0, %v1377
      %v1460 = vsub.f32 0.0, %v1382
      %v1461 = vsub.f32 0.0, %v1385
      %v1462 = vsub.f32 0.0, %v1390
      %v1463 = vsub.f32 0.0, %v1393
      %v1464 = vsub.f32 0.0, %v1398
      %v1465 = vsub.f32 0.0, %v1401
      %v1466 = vsub.f32 0.0, %v1406
      %v1467 = vsub.f32 0.0, %v1409
      %v1468 = vsub.f32 0.0, %v1414
      %v1469 = vsub.f32 0.0, %v1417
      %v1470 = vsub.f32 0.0, %v1422
      %v1471 = vsub.f32 0.0, %v1425
      %v1472 = vsub.f32 0.0, %v1430
      %v1473 = vsub.f32 0.0, %v1433
      %v1474 = vsub.f32 0.0, %v1438
      %v1475 = vsub.f32 0.0, %v1441
      %v1476 = vmul.f32 %v1444, 1.442695
      %v1477 = vpow.pop %v1476
      %v1478 = vmul.f32 %v1445, 1.442695
      %v1479 = vpow.pop %v1478
      %v1480 = vmul.f32 %v1446, 1.442695
      %v1481 = vpow.pop %v1480
      %v1482 = vmul.f32 %v1447, 1.442695
      %v1483 = vpow.pop %v1482
      %v1484 = vmul.f32 %v1448, 1.442695
      %v1485 = vpow.pop %v1484
      %v1486 = vmul.f32 %v1449, 1.442695
      %v1487 = vpow.pop %v1486
      %v1488 = vmul.f32 %v1450, 1.442695
      %v1489 = vpow.pop %v1488
      %v1490 = vmul.f32 %v1451, 1.442695
      %v1491 = vpow.pop %v1490
      %v1492 = vmul.f32 %v1452, 1.442695
      %v1493 = vpow.pop %v1492
      %v1494 = vmul.f32 %v1453, 1.442695
      %v1495 = vpow.pop %v1494
      %v1496 = vmul.f32 %v1454, 1.442695
      %v1497 = vpow.pop %v1496
      %v1498 = vmul.f32 %v1455, 1.442695
      %v1499 = vpow.pop %v1498
      %v1500 = vmul.f32 %v1456, 1.442695
      %v1501 = vpow.pop %v1500
      %v1502 = vmul.f32 %v1457, 1.442695
      %v1503 = vpow.pop %v1502
      %v1504 = vmul.f32 %v1458, 1.442695
      %v1505 = vpow.pop %v1504
      %v1506 = vmul.f32 %v1459, 1.442695
      %v1507 = vpow.pop %v1506
      %v1508 = vmul.f32 %v1460, 1.442695
      %v1509 = vpow.pop %v1508
      %v1510 = vmul.f32 %v1461, 1.442695
      %v1511 = vpow.pop %v1510
      %v1512 = vmul.f32 %v1462, 1.442695
      %v1513 = vpow.pop %v1512
      %v1514 = vmul.f32 %v1463, 1.442695
      %v1515 = vpow.pop %v1514
      %v1516 = vmul.f32 %v1464, 1.442695
      %v1517 = vpow.pop %v1516
      %v1518 = vmul.f32 %v1465, 1.442695
      %v1519 = vpow.pop %v1518
      %v1520 = vmul.f32 %v1466, 1.442695
      %v1521 = vpow.pop %v1520
      %v1522 = vmul.f32 %v1467, 1.442695
      %v1523 = vpow.pop %v1522
      %v1524 = vmul.f32 %v1468, 1.442695
      %v1525 = vpow.pop %v1524
      %v1526 = vmul.f32 %v1469, 1.442695
      %v1527 = vpow.pop %v1526
      %v1528 = vmul.f32 %v1470, 1.442695
      %v1529 = vpow.pop %v1528
      %v1530 = vmul.f32 %v1471, 1.442695
      %v1531 = vpow.pop %v1530
      %v1532 = vmul.f32 %v1472, 1.442695
      %v1533 = vpow.pop %v1532
      %v1534 = vmul.f32 %v1473, 1.442695
      %v1535 = vpow.pop %v1534
      %v1536 = vmul.f32 %v1474, 1.442695
      %v1537 = vpow.pop %v1536
      %v1538 = vmul.f32 %v1475, 1.442695
      %v1539 = vpow.pop %v1538
      %v1540 = vadd.f32 %v1477, 1.0
      %v1541 = vadd.f32 %v1479, 1.0
      %v1542 = vadd.f32 %v1481, 1.0
      %v1543 = vadd.f32 %v1483, 1.0
      %v1544 = vadd.f32 %v1485, 1.0
      %v1545 = vadd.f32 %v1487, 1.0
      %v1546 = vadd.f32 %v1489, 1.0
      %v1547 = vadd.f32 %v1491, 1.0
      %v1548 = vadd.f32 %v1493, 1.0
      %v1549 = vadd.f32 %v1495, 1.0
      %v1550 = vadd.f32 %v1497, 1.0
      %v1551 = vadd.f32 %v1499, 1.0
      %v1552 = vadd.f32 %v1501, 1.0
      %v1553 = vadd.f32 %v1503, 1.0
      %v1554 = vadd.f32 %v1505, 1.0
      %v1555 = vadd.f32 %v1507, 1.0
      %v1556 = vadd.f32 %v1509, 1.0
      %v1557 = vadd.f32 %v1511, 1.0
      %v1558 = vadd.f32 %v1513, 1.0
      %v1559 = vadd.f32 %v1515, 1.0
      %v1560 = vadd.f32 %v1517, 1.0
      %v1561 = vadd.f32 %v1519, 1.0
      %v1562 = vadd.f32 %v1521, 1.0
      %v1563 = vadd.f32 %v1523, 1.0
      %v1564 = vadd.f32 %v1525, 1.0
      %v1565 = vadd.f32 %v1527, 1.0
      %v1566 = vadd.f32 %v1529, 1.0
      %v1567 = vadd.f32 %v1531, 1.0
      %v1568 = vadd.f32 %v1533, 1.0
      %v1569 = vadd.f32 %v1535, 1.0
      %v1570 = vadd.f32 %v1537, 1.0
      %v1571 = vadd.f32 %v1539, 1.0
      %v1572 = vrcp.pop %v1540
      %v1573 = vrcp.pop %v1541
      %v1574 = vrcp.pop %v1542
      %v1575 = vrcp.pop %v1543
      %v1576 = vrcp.pop %v1544
      %v1577 = vrcp.pop %v1545
      %v1578 = vrcp.pop %v1546
      %v1579 = vrcp.pop %v1547
      %v1580 = vrcp.pop %v1548
      %v1581 = vrcp.pop %v1549
      %v1582 = vrcp.pop %v1550
      %v1583 = vrcp.pop %v1551
      %v1584 = vrcp.pop %v1552
      %v1585 = vrcp.pop %v1553
      %v1586 = vrcp.pop %v1554
      %v1587 = vrcp.pop %v1555
      %v1588 = vrcp.pop %v1556
      %v1589 = vrcp.pop %v1557
      %v1590 = vrcp.pop %v1558
      %v1591 = vrcp.pop %v1559
      %v1592 = vrcp.pop %v1560
      %v1593 = vrcp.pop %v1561
      %v1594 = vrcp.pop %v1562
      %v1595 = vrcp.pop %v1563
      %v1596 = vrcp.pop %v1564
      %v1597 = vrcp.pop %v1565
      %v1598 = vrcp.pop %v1566
      %v1599 = vrcp.pop %v1567
      %v1600 = vrcp.pop %v1568
      %v1601 = vrcp.pop %v1569
      %v1602 = vrcp.pop %v1570
      %v1603 = vrcp.pop %v1571
      %v1604 = vpack.c.bf16 %v1573, %v1572
      %v1605 = vpack.c.bf16 %v1575, %v1574
      %v1606 = vpack.c.bf16 %v1577, %v1576
      %v1607 = vpack.c.bf16 %v1579, %v1578
      %v1608 = vpack.c.bf16 %v1581, %v1580
      %v1609 = vpack.c.bf16 %v1583, %v1582
      %v1610 = vpack.c.bf16 %v1585, %v1584
      %v1611 = vpack.c.bf16 %v1587, %v1586
      %v1612 = vpack.c.bf16 %v1589, %v1588
      %v1613 = vpack.c.bf16 %v1591, %v1590
      %v1614 = vpack.c.bf16 %v1593, %v1592
      %v1615 = vpack.c.bf16 %v1595, %v1594
      %v1616 = vpack.c.bf16 %v1597, %v1596
      %v1617 = vpack.c.bf16 %v1599, %v1598
      %v1618 = vpack.c.bf16 %v1601, %v1600
      %v1619 = vpack.c.bf16 %v1603, %v1602
      %v1636 = vunpack.c.l.b16 %v1604
      %v1637 = vunpack.c.h.b16 %v1604
      %v1638 = vunpack.c.l.b16 %v1605
      %v1639 = vunpack.c.h.b16 %v1605
      %v1640 = vunpack.c.l.b16 %v1606
      %v1641 = vunpack.c.h.b16 %v1606
      %v1642 = vunpack.c.l.b16 %v1607
      %v1643 = vunpack.c.h.b16 %v1607
      %v1644 = vunpack.c.l.b16 %v1608
      %v1645 = vunpack.c.h.b16 %v1608
      %v1646 = vunpack.c.l.b16 %v1609
      %v1647 = vunpack.c.h.b16 %v1609
      %v1648 = vunpack.c.l.b16 %v1610
      %v1649 = vunpack.c.h.b16 %v1610
      %v1650 = vunpack.c.l.b16 %v1611
      %v1651 = vunpack.c.h.b16 %v1611
      %v1652 = vunpack.c.l.b16 %v1612
      %v1653 = vunpack.c.h.b16 %v1612
      %v1654 = vunpack.c.l.b16 %v1613
      %v1655 = vunpack.c.h.b16 %v1613
      %v1656 = vunpack.c.l.b16 %v1614
      %v1657 = vunpack.c.h.b16 %v1614
      %v1658 = vunpack.c.l.b16 %v1615
      %v1659 = vunpack.c.h.b16 %v1615
      %v1660 = vunpack.c.l.b16 %v1616
      %v1661 = vunpack.c.h.b16 %v1616
      %v1662 = vunpack.c.l.b16 %v1617
      %v1663 = vunpack.c.h.b16 %v1617
      %v1664 = vunpack.c.l.b16 %v1618
      %v1665 = vunpack.c.h.b16 %v1618
      %v1666 = vunpack.c.l.b16 %v1619
      %v1667 = vunpack.c.h.b16 %v1619
      %v1668 = vpack.c.b16 %v1636, %v1636
      %v1669 = vpack.c.b16 %v1637, %v1637
      %v1670 = vpack.c.b16 %v1638, %v1638
      %v1671 = vpack.c.b16 %v1639, %v1639
      %v1672 = vpack.c.b16 %v1640, %v1640
      %v1673 = vpack.c.b16 %v1641, %v1641
      %v1674 = vpack.c.b16 %v1642, %v1642
      %v1675 = vpack.c.b16 %v1643, %v1643
      %v1676 = vpack.c.b16 %v1644, %v1644
      %v1677 = vpack.c.b16 %v1645, %v1645
      %v1678 = vpack.c.b16 %v1646, %v1646
      %v1679 = vpack.c.b16 %v1647, %v1647
      %v1680 = vpack.c.b16 %v1648, %v1648
      %v1681 = vpack.c.b16 %v1649, %v1649
      %v1682 = vpack.c.b16 %v1650, %v1650
      %v1683 = vpack.c.b16 %v1651, %v1651
      %v1684 = vpack.c.b16 %v1652, %v1652
      %v1685 = vpack.c.b16 %v1653, %v1653
      %v1686 = vpack.c.b16 %v1654, %v1654
      %v1687 = vpack.c.b16 %v1655, %v1655
      %v1688 = vpack.c.b16 %v1656, %v1656
      %v1689 = vpack.c.b16 %v1657, %v1657
      %v1690 = vpack.c.b16 %v1658, %v1658
      %v1691 = vpack.c.b16 %v1659, %v1659
      %v1692 = vpack.c.b16 %v1660, %v1660
      %v1693 = vpack.c.b16 %v1661, %v1661
      %v1694 = vpack.c.b16 %v1662, %v1662
      %v1695 = vpack.c.b16 %v1663, %v1663
      %v1696 = vpack.c.b16 %v1664, %v1664
      %v1697 = vpack.c.b16 %v1665, %v1665
      %v1698 = vpack.c.b16 %v1666, %v1666
      %v1699 = vpack.c.b16 %v1667, %v1667
      %1732 = vst [vmem:[%s280] sm:$0xf] %v1668
      %1733 = vst [vmem:[%s280 + $0x4] sm:$0xf] %v1669
      %1734 = vst [vmem:[%s280 + $0x8] sm:$0xf] %v1670
      %1735 = vst [vmem:[%s280 + $0xc] sm:$0xf] %v1671
      %1736 = vst [vmem:[%s280 + $0x10] sm:$0xf] %v1672
      %1737 = vst [vmem:[%s280 + $0x14] sm:$0xf] %v1673
      %1738 = vst [vmem:[%s280 + $0x18] sm:$0xf] %v1674
      %1739 = vst [vmem:[%s280 + $0x1c] sm:$0xf] %v1675
      %1740 = vst [vmem:[%s280 + $0x20] sm:$0xf] %v1676
      %1741 = vst [vmem:[%s280 + $0x24] sm:$0xf] %v1677
      %1742 = vst [vmem:[%s280 + $0x28] sm:$0xf] %v1678
      %1743 = vst [vmem:[%s280 + $0x2c] sm:$0xf] %v1679
      %1744 = vst [vmem:[%s280 + $0x30] sm:$0xf] %v1680
      %1745 = vst [vmem:[%s280 + $0x34] sm:$0xf] %v1681
      %1746 = vst [vmem:[%s280 + $0x38] sm:$0xf] %v1682
      %1747 = vst [vmem:[%s280 + $0x3c] sm:$0xf] %v1683
      %1748 = vst [vmem:[%s280 + $0x40] sm:$0xf] %v1684
      %1749 = vst [vmem:[%s280 + $0x44] sm:$0xf] %v1685
      %1750 = vst [vmem:[%s280 + $0x48] sm:$0xf] %v1686
      %1751 = vst [vmem:[%s280 + $0x4c] sm:$0xf] %v1687
      %1752 = vst [vmem:[%s280 + $0x50] sm:$0xf] %v1688
      %1753 = vst [vmem:[%s280 + $0x54] sm:$0xf] %v1689
      %1754 = vst [vmem:[%s280 + $0x58] sm:$0xf] %v1690
      %1755 = vst [vmem:[%s280 + $0x5c] sm:$0xf] %v1691
      %1756 = vst [vmem:[%s280 + $0x60] sm:$0xf] %v1692
      %1757 = vst [vmem:[%s280 + $0x64] sm:$0xf] %v1693
      %1758 = vst [vmem:[%s280 + $0x68] sm:$0xf] %v1694
      %1759 = vst [vmem:[%s280 + $0x6c] sm:$0xf] %v1695
      %1760 = vst [vmem:[%s280 + $0x70] sm:$0xf] %v1696
      %1761 = vst [vmem:[%s280 + $0x74] sm:$0xf] %v1697
      %1762 = vst [vmem:[%s280 + $0x78] sm:$0xf] %v1698
      %1763 = vst [vmem:[%s280 + $0x7c] sm:$0xf] %v1699
      %s1764 = smul.u32 32, %s18
      %p1765 = scmp.lt.s32.totalorder %s1764, 63
      %s1766 = scalar_select %p1765, %s1764, 63
      %s1767 = smul.addr %s1766, 4
      %s1768 = scalar_lea.vmem %s7, %s1767
      // Predicated region
      $region49: #{neural_net_forward.1} parent=47 // pred_check
        %p1769 = pneg %p188
      $region50: #{neural_net_forward.1} parent=47 // pred_check_branch
        %1771 = sbr.rel (%p1769) target = $region52
      $region51: #{neural_net_forward.1} parent=47 // pred_region
        %s1772 = smul.u32 32, %s18
      $region52: #{neural_net_forward.1} parent=47 // pred_fallthru
        _
    $region48: #{neural_net_forward.1} parent=5 // pred_fallthru
      _
    %p1773 = scmp.le.s32.totalorder 2, %s13
    // Predicated region
    $region53: #{neural_net_forward.1} parent=5 // pred_check
      %p1774 = pneg %p1773
    $region54: #{neural_net_forward.1} parent=5 // pred_check_branch
      %1776 = sbr.rel (%p1774) target = $region56
    $region55: #{neural_net_forward.1} parent=5 // pred_region
      %s1777 = ssub.s32 %s13, 2
      // Predicated region
      $region57: #{neural_net_forward.1} parent=55 // pred_check
        %p1778 = pneg %p194
      $region58: #{neural_net_forward.1} parent=55 // pred_check_branch
        %1780 = sbr.rel (%p1778) target = $region60
      $region59: #{neural_net_forward.1} parent=55 // pred_region
        %s1781 = smul.u32 32, %s19
        %p1782 = scmp.lt.s32.totalorder %s1781, 63
        %s1783 = scalar_select %p1782, %s1781, 63
        %s1784 = smul.addr %s1783, 4
        %s1785 = scalar_lea.vmem %s7, %s1784
      $region60: #{neural_net_forward.1} parent=55 // pred_fallthru
        _
    $region56: #{neural_net_forward.1} parent=5 // pred_fallthru
      _
  $region6: #{neural_net_forward.1} parent=0 // loop_footer
    %s17 = sadd.s32 1, %s13
  $region7: #{neural_net_forward.1} parent=0 // loop_footer_branch
    %12 = sbr.rel target = $region3
  $region8: #{neural_net_forward.1} parent=0 // loop_exit
    _

</llo_original>
